<compile_context>
chip_gen: v6e
topology: v6e:2x2x1
jax: 0.10.0
libtpu: 0.0.40
codegen_flags: <defaults>
</compile_context>

<pallas_src>
import functools

import jax
import jax.numpy as jnp
from jax import lax
from jax.experimental import pallas as pl
from jax.experimental.pallas import tpu as pltpu

MAX_SIGMA = 10.0
MIN_SIGMA = 0.0001
LN_EPS = 1e-5          # PyTorch nn.LayerNorm default
LANE = 128
SUBLANE = 8


def _round_up(v, m):
    return ((v + m - 1) // m) * m


def _transition_kernel(x_ref, wfc_ref, bfc_ref, g_ref, beta_ref,
                       wh_ref, bh_ref, mu_ref, sigma_ref, *,
                       d_real, inv_d, c0, c1):
    dp = mu_ref.shape[-1]

    # ---- h = x @ Wfc + bfc (bf16 operands on the MXU, f32 accumulation) ----
    x = x_ref[...]                                            # (TB, DP) bf16
    h = jnp.dot(x, wfc_ref[...], preferred_element_type=jnp.float32) + bfc_ref[...]

    # ---- LayerNorm (two-pass: mean, then centered variance) ---------------
    # Padded feature columns of h are exactly 0 (zero weight cols / zero bias),
    # so the full-lane sum divided by the real D is the exact mean.
    mean = jnp.sum(h, axis=-1, keepdims=True) * inv_d
    c = h - mean
    if dp != d_real:
        # Padded columns of c are (-mean); mask them out of the variance so the
        # centered form stays exact (no E[x^2]-E[x]^2 cancellation).
        col = lax.broadcasted_iota(jnp.int32, (1, dp), 1)
        c_var = jnp.where(col < d_real, c, 0.0)
    else:
        c_var = c
    var = jnp.sum(c_var * c_var, axis=-1, keepdims=True) * inv_d
    inv_std = lax.rsqrt(var + LN_EPS)
    # Padded gamma/beta are 0 -> padded columns re-zeroed before the heads.
    hn = c * inv_std * g_ref[...] + beta_ref[...]
    hn = jnp.maximum(hn, 0.0)                                 # ReLU

    # ---- fused mu / sigma heads: one (TB, DP) x (DP, 2*DP) MXU matmul ------
    z = jnp.dot(hn.astype(jnp.bfloat16), wh_ref[...],
                preferred_element_type=jnp.float32) + bh_ref[...]
    mu_ref[...] = z[:, :dp]

    # sigma = MIN + (MAX-MIN)*sigmoid(logits) = c0 + c1*tanh(0.5*logits);
    # the 0.5 is folded (exactly) into the sigma-head weights at prep time.
    sigma_ref[...] = c0 + c1 * jnp.tanh(z[:, dp:])


def init_raw_params(key, D):
    """Synthetic params in the PyTorch layout: Linear weight (out,in), bias (out,)."""
    ks = jax.random.split(key, 6)
    bound = 1.0 / jnp.sqrt(D)
    u = lambda k, shape: jax.random.uniform(k, shape, jnp.float32, -bound, bound)
    return {
        "fc.weight": u(ks[0], (D, D)), "fc.bias": u(ks[1], (D,)),
        "ln.weight": jnp.ones((D,), jnp.float32), "ln.bias": jnp.zeros((D,), jnp.float32),
        "fc_mu.weight": u(ks[2], (D, D)), "fc_mu.bias": u(ks[3], (D,)),
        "fc_sigma.weight": u(ks[4], (D, D)), "fc_sigma.bias": u(ks[5], (D,)),
    }
    # TODO(synk): reward_net / reward_prediction, sample_prediction (randn) and
    # the Adam optimizer / save() are not part of this forward path.


def prepare_params(raw, D):
    """One-time packing (hoisted out of the forward): transpose to (in,out),
    lane-pad to DP, fuse mu/sigma heads into one (DP, 2*DP) weight, fold the
    tanh half-angle 0.5 into the sigma head (exact power-of-two scale), and
    cast matmul weights to bf16."""
    dp = _round_up(D, LANE)
    f32 = jnp.float32
    w_fc = jnp.zeros((dp, dp), f32).at[:D, :D].set(raw["fc.weight"].T).astype(jnp.bfloat16)
    b_fc = jnp.zeros((1, dp), f32).at[0, :D].set(raw["fc.bias"])
    g    = jnp.zeros((1, dp), f32).at[0, :D].set(raw["ln.weight"])
    beta = jnp.zeros((1, dp), f32).at[0, :D].set(raw["ln.bias"])
    w_h = (jnp.zeros((dp, 2 * dp), f32)
           .at[:D, :D].set(raw["fc_mu.weight"].T)
           .at[:D, dp:dp + D].set(0.5 * raw["fc_sigma.weight"].T)
           .astype(jnp.bfloat16))
    b_h = (jnp.zeros((1, 2 * dp), f32)
           .at[0, :D].set(raw["fc_mu.bias"])
           .at[0, dp:dp + D].set(0.5 * raw["fc_sigma.bias"]))
    return {"D": D, "dp": dp, "w_fc": w_fc, "b_fc": b_fc, "g": g, "beta": beta,
            "w_h": w_h, "b_h": b_h}


def probabilistic_transition_forward(x, prepped, *, block_b=1024):
    """x: (B, D) f32. prepped: output of prepare_params()."""
    B, D = x.shape
    assert D == prepped["D"]
    dp = prepped["dp"]

    # Batch tile: multiple of 8, as large as block_b allows (amortize per-step
    # overhead), but capped so the "parallel" grid has >=2 steps when the batch
    # permits -- keeps both v7x TensorCores busy; the extra step on v5e/v6e is
    # ~0.35us, negligible.
    b_r8 = _round_up(B, SUBLANE)
    tb = max(SUBLANE, min(_round_up(block_b, SUBLANE), b_r8))
    if b_r8 >= 2 * SUBLANE:
        tb = min(tb, max(SUBLANE, (b_r8 // 2 // SUBLANE) * SUBLANE))
    b_pad = _round_up(B, tb)
    grid = (b_pad // tb,)

    # x streamed as bf16 (halves input DMA bytes; MXU consumes bf16 operands).
    x_p = jnp.pad(x.astype(jnp.bfloat16), ((0, b_pad - B), (0, dp - D)))

    kernel = functools.partial(
        _transition_kernel, d_real=D, inv_d=1.0 / D,
        c0=MIN_SIGMA + 0.5 * (MAX_SIGMA - MIN_SIGMA),
        c1=0.5 * (MAX_SIGMA - MIN_SIGMA))

    w_fc, b_fc, g, beta, w_h, b_h = (prepped[k] for k in
                                     ("w_fc", "b_fc", "g", "beta", "w_h", "b_h"))

    # Explicit VMEM budget: (worst-case double-buffered) weights + 2x bf16 x
    # tile + 2x two f32 output tiles + slack; clamped to 64 MiB so it also
    # leaves headroom under v7x's physical VMEM.
    weight_bytes = sum(int(a.size) * a.dtype.itemsize
                       for a in (w_fc, b_fc, g, beta, w_h, b_h))
    stream_bytes = 2 * (tb * dp * 2) + 2 * (2 * tb * dp * 4)
    vmem_limit = int(min(max(2 * weight_bytes + stream_bytes + (4 << 20), 32 << 20),
                         64 << 20))

    flops = 2 * b_pad * dp * (dp + 2 * dp)            # fc + fused heads
    transcendentals = b_pad * dp + b_pad              # tanh (sigma half) + rsqrt/row
    bytes_accessed = (x_p.size * 2 + weight_bytes + 2 * b_pad * dp * 4)

    def call(single_buffer_weights):
        const_kw = ({"pipeline_mode": pl.Buffered(1)} if single_buffer_weights else {})
        cspec = lambda shape: pl.BlockSpec(shape, lambda i: (0, 0), **const_kw)
        return pl.pallas_call(
            kernel,
            out_shape=(jax.ShapeDtypeStruct((b_pad, dp), jnp.float32),
                       jax.ShapeDtypeStruct((b_pad, dp), jnp.float32)),
            grid_spec=pltpu.PrefetchScalarGridSpec(
                num_scalar_prefetch=0,
                grid=grid,
                in_specs=[
                    pl.BlockSpec((tb, dp), lambda i: (i, 0)),   # x batch tile (bf16)
                    cspec((dp, dp)),                            # w_fc (resident)
                    cspec((1, dp)),                             # b_fc
                    cspec((1, dp)),                             # ln gamma
                    cspec((1, dp)),                             # ln beta
                    cspec((dp, 2 * dp)),                        # fused heads W
                    cspec((1, 2 * dp)),                         # fused heads b
                ],
                out_specs=(pl.BlockSpec((tb, dp), lambda i: (i, 0)),
                           pl.BlockSpec((tb, dp), lambda i: (i, 0))),
            ),
            compiler_params=pltpu.CompilerParams(
                dimension_semantics=("parallel",),
                vmem_limit_bytes=vmem_limit),
            cost_estimate=pl.CostEstimate(
                flops=flops, transcendentals=transcendentals,
                bytes_accessed=bytes_accessed),
        )(x_p, w_fc, b_fc, g, beta, w_h, b_h)

    try:
        mu_p, sigma_p = call(True)       # constant-index weights single-buffered
    except Exception:
        # This JAX build rejected pipeline_mode -> fall back to default buffering.
        mu_p, sigma_p = call(False)

    return mu_p[:B, :D], sigma_p[:B, :D]


def reference_forward(x, raw):
    """Pure-JAX reference on the raw (PyTorch-layout) params. Matmuls use the
    same bf16-operand / f32-accumulate precision as the MXU kernel; all other
    math is f32 (standard sigmoid, two-pass LayerNorm)."""
    bf16 = jnp.bfloat16

    def lin(v, w, b):
        return jnp.dot(v.astype(bf16), w.T.astype(bf16),
                       preferred_element_type=jnp.float32) + b

    h = lin(x, raw["fc.weight"], raw["fc.bias"])
    mean = jnp.mean(h, axis=-1, keepdims=True)
    var = jnp.mean((h - mean) ** 2, axis=-1, keepdims=True)
    h = (h - mean) * lax.rsqrt(var + LN_EPS) * raw["ln.weight"] + raw["ln.bias"]
    h = jnp.maximum(h, 0.0)
    mu = lin(h, raw["fc_mu.weight"], raw["fc_mu.bias"])
    sigma = jax.nn.sigmoid(lin(h, raw["fc_sigma.weight"], raw["fc_sigma.bias"]))
    sigma = MIN_SIGMA + (MAX_SIGMA - MIN_SIGMA) * sigma
    return mu, sigma


if __name__ == "__main__":
    key = jax.random.PRNGKey(0)
    B, D = 16, 32                        # batch, encoder_feature_dim
    k_x, k_p = jax.random.split(key)
    x = jax.random.normal(k_x, (B, D), jnp.float32)
    raw = init_raw_params(k_p, D)
    prepped = prepare_params(raw, D)     # one-time pad / transpose / bf16 cast

    # Default block_b; the >=2-step cap gives a (2,) batch grid at B=16.
    mu, sigma = probabilistic_transition_forward(x, prepped)
    jax.block_until_ready((mu, sigma))

    mu_ref, sigma_ref = reference_forward(x, raw)
    assert mu.shape == (B, D) and sigma.shape == (B, D)
    mu_err = float(jnp.max(jnp.abs(mu - mu_ref)))
    sg_err = float(jnp.max(jnp.abs(sigma - sigma_ref)))
    assert jnp.allclose(mu, mu_ref, atol=1e-2, rtol=1e-2), f"mu max err {mu_err}"
    assert jnp.allclose(sigma, sigma_ref, atol=1e-2, rtol=1e-2), f"sigma max err {sg_err}"
    assert bool(jnp.all(sigma >= MIN_SIGMA - 1e-5))
    assert bool(jnp.all(sigma <= MAX_SIGMA + 1e-5))
    print("KERNEL_OK")
</pallas_src>

<mosaic_0001>
module attributes {stable_mosaic.version = 11 : i64} {
  func.func @_transition_kernel(%arg0: i32, %arg1: memref<8x128xbf16, #tpu.memory_space<vmem>>, %arg2: memref<128x128xbf16, #tpu.memory_space<vmem>>, %arg3: memref<1x128xf32, #tpu.memory_space<vmem>>, %arg4: memref<1x128xf32, #tpu.memory_space<vmem>>, %arg5: memref<1x128xf32, #tpu.memory_space<vmem>>, %arg6: memref<128x256xbf16, #tpu.memory_space<vmem>>, %arg7: memref<1x256xf32, #tpu.memory_space<vmem>>, %arg8: memref<8x128xf32, #tpu.memory_space<vmem>>, %arg9: memref<8x128xf32, #tpu.memory_space<vmem>>) attributes {dimension_semantics = [#tpu.dimension_semantics<parallel>], iteration_bounds = array<i64: 2>, scalar_prefetch = 0 : i64, scratch_operands = 0 : i64, tpu.core_type = #tpu.core_type<tc>, window_params = [{transform_indices = @transform_0, window_bounds = array<i64: 8, 128>}, {pipeline_mode = #tpu.pipeline_mode<synchronous>, transform_indices = @transform_1, window_bounds = array<i64: 128, 128>}, {pipeline_mode = #tpu.pipeline_mode<synchronous>, transform_indices = @transform_2, window_bounds = array<i64: 1, 128>}, {pipeline_mode = #tpu.pipeline_mode<synchronous>, transform_indices = @transform_3, window_bounds = array<i64: 1, 128>}, {pipeline_mode = #tpu.pipeline_mode<synchronous>, transform_indices = @transform_4, window_bounds = array<i64: 1, 128>}, {pipeline_mode = #tpu.pipeline_mode<synchronous>, transform_indices = @transform_5, window_bounds = array<i64: 128, 256>}, {pipeline_mode = #tpu.pipeline_mode<synchronous>, transform_indices = @transform_6, window_bounds = array<i64: 1, 256>}, {transform_indices = @transform_7, window_bounds = array<i64: 8, 128>}, {transform_indices = @transform_8, window_bounds = array<i64: 8, 128>}]} {
    %c0 = arith.constant 0 : index
    %c0_0 = arith.constant 0 : index
    %0 = vector.load %arg1[%c0, %c0_0] : memref<8x128xbf16, #tpu.memory_space<vmem>>, vector<8x128xbf16>
    %c0_1 = arith.constant 0 : index
    %c0_2 = arith.constant 0 : index
    %1 = vector.load %arg2[%c0_1, %c0_2] : memref<128x128xbf16, #tpu.memory_space<vmem>>, vector<128x128xbf16>
    %cst = arith.constant dense<0.000000e+00> : vector<8x128xf32>
    %2 = tpu.matmul %0, %1, %cst {dimension_numbers = #tpu.dot_dimension_numbers<[1], [0], [0], [1], [0, 0, 1, 1], [], []>} : vector<8x128xbf16>, vector<128x128xbf16>, vector<8x128xf32> -> vector<8x128xf32>
    %c0_3 = arith.constant 0 : index
    %c0_4 = arith.constant 0 : index
    %3 = vector.load %arg3[%c0_3, %c0_4] : memref<1x128xf32, #tpu.memory_space<vmem>>, vector<1x128xf32>
    %4 = vector.broadcast %3 : vector<1x128xf32> to vector<8x128xf32>
    %5 = arith.addf %2, %4 : vector<8x128xf32>
    %cst_5 = arith.constant dense<0.000000e+00> : vector<8xf32>
    %6 = vector.multi_reduction <add>, %5, %cst_5 [1] : vector<8x128xf32> to vector<8xf32>
    %7 = vector.shape_cast %6 : vector<8xf32> to vector<8x1xf32>
    %cst_6 = arith.constant 3.125000e-02 : f32
    %8 = vector.broadcast %cst_6 : f32 to vector<8x1xf32>
    %9 = arith.mulf %7, %8 : vector<8x1xf32>
    %10 = vector.broadcast %9 : vector<8x1xf32> to vector<8x128xf32>
    %11 = arith.subf %5, %10 : vector<8x128xf32>
    %12 = tpu.iota {dimensions = array<i32: 1>} : vector<1x128xi32>
    %c32_i32 = arith.constant 32 : i32
    %13 = vector.broadcast %c32_i32 : i32 to vector<1x128xi32>
    %14 = arith.cmpi slt, %12, %13 : vector<1x128xi32>
    %cst_7 = arith.constant 0.000000e+00 : f32
    %15 = vector.shape_cast %14 : vector<1x128xi1> to vector<1x128xi1>
    %16 = vector.broadcast %15 : vector<1x128xi1> to vector<8x128xi1>
    %17 = vector.broadcast %cst_7 : f32 to vector<8x128xf32>
    %18 = arith.select %16, %11, %17 : vector<8x128xi1>, vector<8x128xf32>
    %19 = arith.mulf %18, %18 : vector<8x128xf32>
    %cst_8 = arith.constant dense<0.000000e+00> : vector<8xf32>
    %20 = vector.multi_reduction <add>, %19, %cst_8 [1] : vector<8x128xf32> to vector<8xf32>
    %21 = vector.shape_cast %20 : vector<8xf32> to vector<8x1xf32>
    %cst_9 = arith.constant 3.125000e-02 : f32
    %22 = vector.broadcast %cst_9 : f32 to vector<8x1xf32>
    %23 = arith.mulf %21, %22 : vector<8x1xf32>
    %cst_10 = arith.constant 9.99999974E-6 : f32
    %24 = vector.broadcast %cst_10 : f32 to vector<8x1xf32>
    %25 = arith.addf %23, %24 : vector<8x1xf32>
    %26 = math.rsqrt %25 : vector<8x1xf32>
    %27 = vector.broadcast %26 : vector<8x1xf32> to vector<8x128xf32>
    %28 = arith.mulf %11, %27 : vector<8x128xf32>
    %c0_11 = arith.constant 0 : index
    %c0_12 = arith.constant 0 : index
    %29 = vector.load %arg4[%c0_11, %c0_12] : memref<1x128xf32, #tpu.memory_space<vmem>>, vector<1x128xf32>
    %30 = vector.broadcast %29 : vector<1x128xf32> to vector<8x128xf32>
    %31 = arith.mulf %28, %30 : vector<8x128xf32>
    %c0_13 = arith.constant 0 : index
    %c0_14 = arith.constant 0 : index
    %32 = vector.load %arg5[%c0_13, %c0_14] : memref<1x128xf32, #tpu.memory_space<vmem>>, vector<1x128xf32>
    %33 = vector.broadcast %32 : vector<1x128xf32> to vector<8x128xf32>
    %34 = arith.addf %31, %33 : vector<8x128xf32>
    %cst_15 = arith.constant 0.000000e+00 : f32
    %35 = vector.broadcast %cst_15 : f32 to vector<8x128xf32>
    %36 = arith.maximumf %34, %35 : vector<8x128xf32>
    %37 = arith.truncf %36 : vector<8x128xf32> to vector<8x128xbf16>
    %c0_16 = arith.constant 0 : index
    %c0_17 = arith.constant 0 : index
    %38 = vector.load %arg6[%c0_16, %c0_17] : memref<128x256xbf16, #tpu.memory_space<vmem>>, vector<128x256xbf16>
    %cst_18 = arith.constant dense<0.000000e+00> : vector<8x256xf32>
    %39 = tpu.matmul %37, %38, %cst_18 {dimension_numbers = #tpu.dot_dimension_numbers<[1], [0], [0], [1], [0, 0, 1, 1], [], []>} : vector<8x128xbf16>, vector<128x256xbf16>, vector<8x256xf32> -> vector<8x256xf32>
    %c0_19 = arith.constant 0 : index
    %c0_20 = arith.constant 0 : index
    %40 = vector.load %arg7[%c0_19, %c0_20] : memref<1x256xf32, #tpu.memory_space<vmem>>, vector<1x256xf32>
    %41 = vector.broadcast %40 : vector<1x256xf32> to vector<8x256xf32>
    %42 = arith.addf %39, %41 : vector<8x256xf32>
    %43 = vector.extract_strided_slice %42 {offsets = [0, 0], sizes = [8, 128], strides = [1, 1]} : vector<8x256xf32> to vector<8x128xf32>
    %c0_21 = arith.constant 0 : index
    %c0_22 = arith.constant 0 : index
    %44 = vector.load %arg8[%c0_21, %c0_22] : memref<8x128xf32, #tpu.memory_space<vmem>>, vector<8x128xf32>
    tpu.vector_store %arg8[%c0_21, %c0_22], %43 {strides = array<i32>} : memref<8x128xf32, #tpu.memory_space<vmem>>, vector<8x128xf32>,
    %45 = vector.extract_strided_slice %42 {offsets = [0, 128], sizes = [8, 128], strides = [1, 1]} : vector<8x256xf32> to vector<8x128xf32>
    %46 = math.tanh %45 : vector<8x128xf32>
    %cst_23 = arith.constant 4.999950e+00 : f32
    %47 = vector.broadcast %cst_23 : f32 to vector<8x128xf32>
    %48 = arith.mulf %47, %46 : vector<8x128xf32>
    %cst_24 = arith.constant 5.000050e+00 : f32
    %49 = vector.broadcast %cst_24 : f32 to vector<8x128xf32>
    %50 = arith.addf %49, %48 : vector<8x128xf32>
    %c0_25 = arith.constant 0 : index
    %c0_26 = arith.constant 0 : index
    %51 = vector.load %arg9[%c0_25, %c0_26] : memref<8x128xf32, #tpu.memory_space<vmem>>, vector<8x128xf32>
    tpu.vector_store %arg9[%c0_25, %c0_26], %50 {strides = array<i32>} : memref<8x128xf32, #tpu.memory_space<vmem>>, vector<8x128xf32>,
    return
  }
  func.func @transform_0(%arg0: i32) -> (i32, i32) {
    %c0_i32 = arith.constant 0 : i32
    %c0_i32_0 = arith.constant 0 : i32
    return %arg0, %c0_i32 : i32, i32
  }
  func.func @transform_1(%arg0: i32) -> (i32, i32) {
    %c0_i32 = arith.constant 0 : i32
    %c0_i32_0 = arith.constant 0 : i32
    %c0_i32_1 = arith.constant 0 : i32
    return %c0_i32, %c0_i32_0 : i32, i32
  }
  func.func @transform_2(%arg0: i32) -> (i32, i32) {
    %c0_i32 = arith.constant 0 : i32
    %c0_i32_0 = arith.constant 0 : i32
    %c0_i32_1 = arith.constant 0 : i32
    return %c0_i32, %c0_i32_0 : i32, i32
  }
  func.func @transform_3(%arg0: i32) -> (i32, i32) {
    %c0_i32 = arith.constant 0 : i32
    %c0_i32_0 = arith.constant 0 : i32
    %c0_i32_1 = arith.constant 0 : i32
    return %c0_i32, %c0_i32_0 : i32, i32
  }
  func.func @transform_4(%arg0: i32) -> (i32, i32) {
    %c0_i32 = arith.constant 0 : i32
    %c0_i32_0 = arith.constant 0 : i32
    %c0_i32_1 = arith.constant 0 : i32
    return %c0_i32, %c0_i32_0 : i32, i32
  }
  func.func @transform_5(%arg0: i32) -> (i32, i32) {
    %c0_i32 = arith.constant 0 : i32
    %c0_i32_0 = arith.constant 0 : i32
    %c0_i32_1 = arith.constant 0 : i32
    return %c0_i32, %c0_i32_0 : i32, i32
  }
  func.func @transform_6(%arg0: i32) -> (i32, i32) {
    %c0_i32 = arith.constant 0 : i32
    %c0_i32_0 = arith.constant 0 : i32
    %c0_i32_1 = arith.constant 0 : i32
    return %c0_i32, %c0_i32_0 : i32, i32
  }
  func.func @transform_7(%arg0: i32) -> (i32, i32) {
    %c0_i32 = arith.constant 0 : i32
    %c0_i32_0 = arith.constant 0 : i32
    return %arg0, %c0_i32 : i32, i32
  }
  func.func @transform_8(%arg0: i32) -> (i32, i32) {
    %c0_i32 = arith.constant 0 : i32
    %c0_i32_0 = arith.constant 0 : i32
    return %arg0, %c0_i32 : i32, i32
  }
}

module attributes {stable_mosaic.version = 11 : i64} {
  func.func @_transition_kernel(%arg0: i32, %arg1: memref<8x128xbf16, #tpu.memory_space<vmem>>, %arg2: memref<128x128xbf16, #tpu.memory_space<vmem>>, %arg3: memref<1x128xf32, #tpu.memory_space<vmem>>, %arg4: memref<1x128xf32, #tpu.memory_space<vmem>>, %arg5: memref<1x128xf32, #tpu.memory_space<vmem>>, %arg6: memref<128x256xbf16, #tpu.memory_space<vmem>>, %arg7: memref<1x256xf32, #tpu.memory_space<vmem>>, %arg8: memref<8x128xf32, #tpu.memory_space<vmem>>, %arg9: memref<8x128xf32, #tpu.memory_space<vmem>>) attributes {dimension_semantics = [#tpu.dimension_semantics<parallel>], iteration_bounds = array<i64: 2>, scalar_prefetch = 0 : i64, scratch_operands = 0 : i64, tpu.core_type = #tpu.core_type<tc>, window_params = [{transform_indices = @transform_0, window_bounds = array<i64: 8, 128>}, {pipeline_mode = #tpu.pipeline_mode<synchronous>, transform_indices = @transform_1, window_bounds = array<i64: 128, 128>}, {pipeline_mode = #tpu.pipeline_mode<synchronous>, transform_indices = @transform_2, window_bounds = array<i64: 1, 128>}, {pipeline_mode = #tpu.pipeline_mode<synchronous>, transform_indices = @transform_3, window_bounds = array<i64: 1, 128>}, {pipeline_mode = #tpu.pipeline_mode<synchronous>, transform_indices = @transform_4, window_bounds = array<i64: 1, 128>}, {pipeline_mode = #tpu.pipeline_mode<synchronous>, transform_indices = @transform_5, window_bounds = array<i64: 128, 256>}, {pipeline_mode = #tpu.pipeline_mode<synchronous>, transform_indices = @transform_6, window_bounds = array<i64: 1, 256>}, {transform_indices = @transform_7, window_bounds = array<i64: 8, 128>}, {transform_indices = @transform_8, window_bounds = array<i64: 8, 128>}]} {
    %c0 = arith.constant 0 : index
    %c0_0 = arith.constant 0 : index
    %0 = vector.load %arg1[%c0, %c0_0] : memref<8x128xbf16, #tpu.memory_space<vmem>>, vector<8x128xbf16>
    %c0_1 = arith.constant 0 : index
    %c0_2 = arith.constant 0 : index
    %1 = vector.load %arg2[%c0_1, %c0_2] : memref<128x128xbf16, #tpu.memory_space<vmem>>, vector<128x128xbf16>
    %cst = arith.constant dense<0.000000e+00> : vector<8x128xf32>
    %2 = tpu.matmul %0, %1, %cst {dimension_numbers = #tpu.dot_dimension_numbers<[1], [0], [0], [1], [0, 0, 1, 1], [], []>} : vector<8x128xbf16>, vector<128x128xbf16>, vector<8x128xf32> -> vector<8x128xf32>
    %c0_3 = arith.constant 0 : index
    %c0_4 = arith.constant 0 : index
    %3 = vector.load %arg3[%c0_3, %c0_4] : memref<1x128xf32, #tpu.memory_space<vmem>>, vector<1x128xf32>
    %4 = vector.broadcast %3 : vector<1x128xf32> to vector<8x128xf32>
    %5 = arith.addf %2, %4 : vector<8x128xf32>
    %cst_5 = arith.constant dense<0.000000e+00> : vector<8xf32>
    %6 = vector.multi_reduction <add>, %5, %cst_5 [1] : vector<8x128xf32> to vector<8xf32>
    %7 = vector.shape_cast %6 : vector<8xf32> to vector<8x1xf32>
    %cst_6 = arith.constant 3.125000e-02 : f32
    %8 = vector.broadcast %cst_6 : f32 to vector<8x1xf32>
    %9 = arith.mulf %7, %8 : vector<8x1xf32>
    %10 = vector.broadcast %9 : vector<8x1xf32> to vector<8x128xf32>
    %11 = arith.subf %5, %10 : vector<8x128xf32>
    %12 = tpu.iota {dimensions = array<i32: 1>} : vector<1x128xi32>
    %c32_i32 = arith.constant 32 : i32
    %13 = vector.broadcast %c32_i32 : i32 to vector<1x128xi32>
    %14 = arith.cmpi slt, %12, %13 : vector<1x128xi32>
    %cst_7 = arith.constant 0.000000e+00 : f32
    %15 = vector.shape_cast %14 : vector<1x128xi1> to vector<1x128xi1>
    %16 = vector.broadcast %15 : vector<1x128xi1> to vector<8x128xi1>
    %17 = vector.broadcast %cst_7 : f32 to vector<8x128xf32>
    %18 = arith.select %16, %11, %17 : vector<8x128xi1>, vector<8x128xf32>
    %19 = arith.mulf %18, %18 : vector<8x128xf32>
    %cst_8 = arith.constant dense<0.000000e+00> : vector<8xf32>
    %20 = vector.multi_reduction <add>, %19, %cst_8 [1] : vector<8x128xf32> to vector<8xf32>
    %21 = vector.shape_cast %20 : vector<8xf32> to vector<8x1xf32>
    %cst_9 = arith.constant 3.125000e-02 : f32
    %22 = vector.broadcast %cst_9 : f32 to vector<8x1xf32>
    %23 = arith.mulf %21, %22 : vector<8x1xf32>
    %cst_10 = arith.constant 9.99999974E-6 : f32
    %24 = vector.broadcast %cst_10 : f32 to vector<8x1xf32>
    %25 = arith.addf %23, %24 : vector<8x1xf32>
    %26 = math.rsqrt %25 : vector<8x1xf32>
    %27 = vector.broadcast %26 : vector<8x1xf32> to vector<8x128xf32>
    %28 = arith.mulf %11, %27 : vector<8x128xf32>
    %c0_11 = arith.constant 0 : index
    %c0_12 = arith.constant 0 : index
    %29 = vector.load %arg4[%c0_11, %c0_12] : memref<1x128xf32, #tpu.memory_space<vmem>>, vector<1x128xf32>
    %30 = vector.broadcast %29 : vector<1x128xf32> to vector<8x128xf32>
    %31 = arith.mulf %28, %30 : vector<8x128xf32>
    %c0_13 = arith.constant 0 : index
    %c0_14 = arith.constant 0 : index
    %32 = vector.load %arg5[%c0_13, %c0_14] : memref<1x128xf32, #tpu.memory_space<vmem>>, vector<1x128xf32>
    %33 = vector.broadcast %32 : vector<1x128xf32> to vector<8x128xf32>
    %34 = arith.addf %31, %33 : vector<8x128xf32>
    %cst_15 = arith.constant 0.000000e+00 : f32
    %35 = vector.broadcast %cst_15 : f32 to vector<8x128xf32>
    %36 = arith.maximumf %34, %35 : vector<8x128xf32>
    %37 = arith.truncf %36 : vector<8x128xf32> to vector<8x128xbf16>
    %c0_16 = arith.constant 0 : index
    %c0_17 = arith.constant 0 : index
    %38 = vector.load %arg6[%c0_16, %c0_17] : memref<128x256xbf16, #tpu.memory_space<vmem>>, vector<128x256xbf16>
    %cst_18 = arith.constant dense<0.000000e+00> : vector<8x256xf32>
    %39 = tpu.matmul %37, %38, %cst_18 {dimension_numbers = #tpu.dot_dimension_numbers<[1], [0], [0], [1], [0, 0, 1, 1], [], []>} : vector<8x128xbf16>, vector<128x256xbf16>, vector<8x256xf32> -> vector<8x256xf32>
    %c0_19 = arith.constant 0 : index
    %c0_20 = arith.constant 0 : index
    %40 = vector.load %arg7[%c0_19, %c0_20] : memref<1x256xf32, #tpu.memory_space<vmem>>, vector<1x256xf32>
    %41 = vector.broadcast %40 : vector<1x256xf32> to vector<8x256xf32>
    %42 = arith.addf %39, %41 : vector<8x256xf32>
    %43 = vector.extract_strided_slice %42 {offsets = [0, 0], sizes = [8, 128], strides = [1, 1]} : vector<8x256xf32> to vector<8x128xf32>
    %c0_21 = arith.constant 0 : index
    %c0_22 = arith.constant 0 : index
    %44 = vector.load %arg8[%c0_21, %c0_22] : memref<8x128xf32, #tpu.memory_space<vmem>>, vector<8x128xf32>
    tpu.vector_store %arg8[%c0_21, %c0_22], %43 {strides = array<i32>} : memref<8x128xf32, #tpu.memory_space<vmem>>, vector<8x128xf32>,
    %45 = vector.extract_strided_slice %42 {offsets = [0, 128], sizes = [8, 128], strides = [1, 1]} : vector<8x256xf32> to vector<8x128xf32>
    %46 = math.tanh %45 : vector<8x128xf32>
    %cst_23 = arith.constant 4.999950e+00 : f32
    %47 = vector.broadcast %cst_23 : f32 to vector<8x128xf32>
    %48 = arith.mulf %47, %46 : vector<8x128xf32>
    %cst_24 = arith.constant 5.000050e+00 : f32
    %49 = vector.broadcast %cst_24 : f32 to vector<8x128xf32>
    %50 = arith.addf %49, %48 : vector<8x128xf32>
    %c0_25 = arith.constant 0 : index
    %c0_26 = arith.constant 0 : index
    %51 = vector.load %arg9[%c0_25, %c0_26] : memref<8x128xf32, #tpu.memory_space<vmem>>, vector<8x128xf32>
    tpu.vector_store %arg9[%c0_25, %c0_26], %50 {strides = array<i32>} : memref<8x128xf32, #tpu.memory_space<vmem>>, vector<8x128xf32>,
    return
  }
  func.func @transform_0(%arg0: i32) -> (i32, i32) {
    %c0_i32 = arith.constant 0 : i32
    %c0_i32_0 = arith.constant 0 : i32
    return %arg0, %c0_i32 : i32, i32
  }
  func.func @transform_1(%arg0: i32) -> (i32, i32) {
    %c0_i32 = arith.constant 0 : i32
    %c0_i32_0 = arith.constant 0 : i32
    %c0_i32_1 = arith.constant 0 : i32
    return %c0_i32, %c0_i32_0 : i32, i32
  }
  func.func @transform_2(%arg0: i32) -> (i32, i32) {
    %c0_i32 = arith.constant 0 : i32
    %c0_i32_0 = arith.constant 0 : i32
    %c0_i32_1 = arith.constant 0 : i32
    return %c0_i32, %c0_i32_0 : i32, i32
  }
  func.func @transform_3(%arg0: i32) -> (i32, i32) {
    %c0_i32 = arith.constant 0 : i32
    %c0_i32_0 = arith.constant 0 : i32
    %c0_i32_1 = arith.constant 0 : i32
    return %c0_i32, %c0_i32_0 : i32, i32
  }
  func.func @transform_4(%arg0: i32) -> (i32, i32) {
    %c0_i32 = arith.constant 0 : i32
    %c0_i32_0 = arith.constant 0 : i32
    %c0_i32_1 = arith.constant 0 : i32
    return %c0_i32, %c0_i32_0 : i32, i32
  }
  func.func @transform_5(%arg0: i32) -> (i32, i32) {
    %c0_i32 = arith.constant 0 : i32
    %c0_i32_0 = arith.constant 0 : i32
    %c0_i32_1 = arith.constant 0 : i32
    return %c0_i32, %c0_i32_0 : i32, i32
  }
  func.func @transform_6(%arg0: i32) -> (i32, i32) {
    %c0_i32 = arith.constant 0 : i32
    %c0_i32_0 = arith.constant 0 : i32
    %c0_i32_1 = arith.constant 0 : i32
    return %c0_i32, %c0_i32_0 : i32, i32
  }
  func.func @transform_7(%arg0: i32) -> (i32, i32) {
    %c0_i32 = arith.constant 0 : i32
    %c0_i32_0 = arith.constant 0 : i32
    return %arg0, %c0_i32 : i32, i32
  }
  func.func @transform_8(%arg0: i32) -> (i32, i32) {
    %c0_i32 = arith.constant 0 : i32
    %c0_i32_0 = arith.constant 0 : i32
    return %arg0, %c0_i32 : i32, i32
  }
}

</mosaic_0001>

<llo_original>
// kernel: tpu_custom_call.1
$region0: #{tpu_custom_call.1}
  #allocation0 [shape = 'u32[]', space=smem, size = 0x4, offset = 0x4, fixed_abs, tag = 'smem constant byte address 0x4 - core index']
  #allocation1 [shape = 'u32[144,128]{1,0:T(1,128)}', space=vmem, size = 0x12000, scoped, tag = 'internal scratch']
  %s0 = inlined_call_operand.hbm [shape: bf16[16,128], index: 0, kind: input, shape index: {}]
  %s1 = inlined_call_operand.hbm [shape: bf16[128,128], index: 1, kind: input, shape index: {}]
  %s2 = inlined_call_operand.vmem [shape: f32[1,128], index: 2, kind: input, shape index: {}]
  %s3 = inlined_call_operand.vmem [shape: f32[1,128], index: 3, kind: input, shape index: {}]
  %s4 = inlined_call_operand.vmem [shape: f32[1,128], index: 4, kind: input, shape index: {}]
  %s5 = inlined_call_operand.hbm [shape: bf16[128,256], index: 5, kind: input, shape index: {}]
  %s6 = inlined_call_operand.vmem [shape: f32[1,256], index: 6, kind: input, shape index: {}]
  %s7 = inlined_call_operand.hbm [shape: f32[16,128], index: 7, kind: output, shape index: {0}]
  %s8 = inlined_call_operand.hbm [shape: f32[16,128], index: 8, kind: output, shape index: {1}]
  %9 = xla_tuple %s7, %s8
  %s10 = sld [smem:[#allocation0]]
  $region81: #{tpu_custom_call.1} parent=0
    _
  %s12 = ssub.s32 1, %s10
  %s13 = scalar_select 0, %s12, %s10
  $region1: #{tpu_custom_call.1} parent=0
    #allocation2 [shape = 'u8[4096]{0}', space=vmem, size = 0x1000, scoped, tag = 'input window, operand 0']
    #allocation3 [shape = 's32[2]{0}', space=sflag, size = 0x8, scoped, tag = 'scoped memory for tpu_custom_call.1']
    #allocation4 [shape = 's32[2]{0}', space=sflag, size = 0x8, scoped, tag = 'scoped memory for tpu_custom_call.1']
    #allocation5 [shape = 'u8[32768]{0}', space=vmem, size = 0x8000, scoped, tag = 'input window, operand 1, single buffered']
    #allocation6 [shape = 's32[1]{0}', space=sflag, size = 0x4, scoped, tag = 'scoped memory for tpu_custom_call.1']
    #allocation7 [shape = 'u8[65536]{0}', space=vmem, size = 0x10000, scoped, tag = 'input window, operand 5, single buffered']
    #allocation8 [shape = 'u8[8192]{0}', space=vmem, size = 0x2000, scoped, tag = 'output window, operand 0']
    #allocation9 [shape = 'u8[8192]{0}', space=vmem, size = 0x2000, scoped, tag = 'output window, operand 1']
    #allocation10 [shape = 's32[2]{0}', space=sflag, size = 0x8, scoped, tag = 'scoped memory for tpu_custom_call.1']
    %14 = vsyncpa [#allocation3], 0
    %s15 = scalar_lea.sflag [#allocation3], 1
    %16 = vsyncpa %s15, 0
    %17 = vsyncpa [#allocation6], 0
    %18 = vsyncpa [#allocation4], 0
    %s19 = scalar_lea.sflag [#allocation4], 1
    %20 = vsyncpa %s19, 0
    %21 = vsyncpa [#allocation10], 0
    %s22 = scalar_lea.sflag [#allocation10], 1
    %23 = vsyncpa %s22, 0
    loop: start=0, step=1, limit=4
    $region2: #{tpu_custom_call.1} parent=1 // loop_pre_header
      _
    $region3: #{tpu_custom_call.1} parent=1 // loop_header
      %s25 = sphi 0, %s29
      %p26 = scmp.ge.s32.totalorder %s25, 4
      %s35 = sphi 0, %s37
      %s38 = sphi 0, %s35
      %s39 = sphi 0, %s38
      %s55 = sphi 0, %s39
      %s59 = sphi 0, %s59
      %s61 = sphi 0, %s59
      %s62 = sphi 0, %s61
      %s76 = sphi 0, %s62
      %s80 = sphi 0, %s80
      %s82 = sphi 0, %s80
      %s83 = sphi 0, %s82
      %s97 = sphi 0, %s83
      %s101 = sphi 0, %s101
      %s103 = sphi 0, %s101
      %s104 = sphi 0, %s103
      %s118 = sphi 0, %s104
      %s122 = sphi 0, %s122
      %s124 = sphi 0, %s122
      %s125 = sphi 0, %s124
      %s139 = sphi 0, %s125
      %s143 = sphi 0, %s143
      %s145 = sphi 0, %s143
      %s146 = sphi 0, %s145
      %s160 = sphi 0, %s146
      %s164 = sphi 0, %s164
      %s166 = sphi 0, %s164
      %s167 = sphi 0, %s166
      %s181 = sphi 0, %s167
      %s187 = sphi 0, %s189
      %s190 = sphi 0, %s187
      %s191 = sphi 0, %s190
      %s207 = sphi 0, %s191
      %s213 = sphi 0, %s215
      %s216 = sphi 0, %s213
      %s217 = sphi 0, %s216
      %s233 = sphi 0, %s217
    $region4: #{tpu_custom_call.1} parent=1 // loop_header_branch
      %28 = sbr.rel (%p26) target = $region8
    $region5: #{tpu_custom_call.1} parent=1 // loop_body
      %s30 = ssub.s32 %s25, 1
      %s31 = ssub.s32 %s25, 2
      %s32 = sadd.s32 %s25, 1
      %s33 = ssub.s32 %s25, %s32
      %p34 = scmp.eq.s32.totalorder %s33, 0
      %s36 = sadd.s32 %s35, 1
      %s37 = scalar_select %p34, %s35, %s36
      %p40 = pneg %p34
      %p41 = scmp.eq.s32.totalorder %s25, 1
      %p42 = por %p40, %p41
      %p43 = scmp.ne.s32.totalorder %s35, %s38
      %p44 = scmp.eq.s32.totalorder %s25, 0
      %p45 = por %p43, %p44
      %p46 = scmp.ne.s32.totalorder %s35, %s38
      %p47 = scmp.eq.s32.totalorder %s30, 1
      %p48 = por %p46, %p47
      %p49 = scmp.ne.s32.totalorder %s38, %s39
      %p50 = scmp.eq.s32.totalorder %s30, 0
      %p51 = por %p49, %p50
      %p52 = scmp.ne.s32.totalorder %s38, %s39
      %p53 = scmp.eq.s32.totalorder %s31, 1
      %p54 = por %p52, %p53
      %p56 = scmp.ne.s32.totalorder %s39, %s55
      %p57 = scmp.eq.s32.totalorder %s31, 0
      %p58 = por %p56, %p57
      %s60 = sadd.s32 %s59, 1
      %p63 = scmp.eq.s32.totalorder %s25, 1
      %p64 = scmp.ne.s32.totalorder %s59, %s61
      %p65 = scmp.eq.s32.totalorder %s25, 0
      %p66 = por %p64, %p65
      %p67 = scmp.ne.s32.totalorder %s59, %s61
      %p68 = scmp.eq.s32.totalorder %s30, 1
      %p69 = por %p67, %p68
      %p70 = scmp.ne.s32.totalorder %s61, %s62
      %p71 = scmp.eq.s32.totalorder %s30, 0
      %p72 = por %p70, %p71
      %p73 = scmp.ne.s32.totalorder %s61, %s62
      %p74 = scmp.eq.s32.totalorder %s31, 1
      %p75 = por %p73, %p74
      %p77 = scmp.ne.s32.totalorder %s62, %s76
      %p78 = scmp.eq.s32.totalorder %s31, 0
      %p79 = por %p77, %p78
      %s81 = sadd.s32 %s80, 1
      %p84 = scmp.eq.s32.totalorder %s25, 1
      %p85 = scmp.ne.s32.totalorder %s80, %s82
      %p86 = scmp.eq.s32.totalorder %s25, 0
      %p87 = por %p85, %p86
      %p88 = scmp.ne.s32.totalorder %s80, %s82
      %p89 = scmp.eq.s32.totalorder %s30, 1
      %p90 = por %p88, %p89
      %p91 = scmp.ne.s32.totalorder %s82, %s83
      %p92 = scmp.eq.s32.totalorder %s30, 0
      %p93 = por %p91, %p92
      %p94 = scmp.ne.s32.totalorder %s82, %s83
      %p95 = scmp.eq.s32.totalorder %s31, 1
      %p96 = por %p94, %p95
      %p98 = scmp.ne.s32.totalorder %s83, %s97
      %p99 = scmp.eq.s32.totalorder %s31, 0
      %p100 = por %p98, %p99
      %s102 = sadd.s32 %s101, 1
      %p105 = scmp.eq.s32.totalorder %s25, 1
      %p106 = scmp.ne.s32.totalorder %s101, %s103
      %p107 = scmp.eq.s32.totalorder %s25, 0
      %p108 = por %p106, %p107
      %p109 = scmp.ne.s32.totalorder %s101, %s103
      %p110 = scmp.eq.s32.totalorder %s30, 1
      %p111 = por %p109, %p110
      %p112 = scmp.ne.s32.totalorder %s103, %s104
      %p113 = scmp.eq.s32.totalorder %s30, 0
      %p114 = por %p112, %p113
      %p115 = scmp.ne.s32.totalorder %s103, %s104
      %p116 = scmp.eq.s32.totalorder %s31, 1
      %p117 = por %p115, %p116
      %p119 = scmp.ne.s32.totalorder %s104, %s118
      %p120 = scmp.eq.s32.totalorder %s31, 0
      %p121 = por %p119, %p120
      %s123 = sadd.s32 %s122, 1
      %p126 = scmp.eq.s32.totalorder %s25, 1
      %p127 = scmp.ne.s32.totalorder %s122, %s124
      %p128 = scmp.eq.s32.totalorder %s25, 0
      %p129 = por %p127, %p128
      %p130 = scmp.ne.s32.totalorder %s122, %s124
      %p131 = scmp.eq.s32.totalorder %s30, 1
      %p132 = por %p130, %p131
      %p133 = scmp.ne.s32.totalorder %s124, %s125
      %p134 = scmp.eq.s32.totalorder %s30, 0
      %p135 = por %p133, %p134
      %p136 = scmp.ne.s32.totalorder %s124, %s125
      %p137 = scmp.eq.s32.totalorder %s31, 1
      %p138 = por %p136, %p137
      %p140 = scmp.ne.s32.totalorder %s125, %s139
      %p141 = scmp.eq.s32.totalorder %s31, 0
      %p142 = por %p140, %p141
      %s144 = sadd.s32 %s143, 1
      %p147 = scmp.eq.s32.totalorder %s25, 1
      %p148 = scmp.ne.s32.totalorder %s143, %s145
      %p149 = scmp.eq.s32.totalorder %s25, 0
      %p150 = por %p148, %p149
      %p151 = scmp.ne.s32.totalorder %s143, %s145
      %p152 = scmp.eq.s32.totalorder %s30, 1
      %p153 = por %p151, %p152
      %p154 = scmp.ne.s32.totalorder %s145, %s146
      %p155 = scmp.eq.s32.totalorder %s30, 0
      %p156 = por %p154, %p155
      %p157 = scmp.ne.s32.totalorder %s145, %s146
      %p158 = scmp.eq.s32.totalorder %s31, 1
      %p159 = por %p157, %p158
      %p161 = scmp.ne.s32.totalorder %s146, %s160
      %p162 = scmp.eq.s32.totalorder %s31, 0
      %p163 = por %p161, %p162
      %s165 = sadd.s32 %s164, 1
      %p168 = scmp.eq.s32.totalorder %s25, 1
      %p169 = scmp.ne.s32.totalorder %s164, %s166
      %p170 = scmp.eq.s32.totalorder %s25, 0
      %p171 = por %p169, %p170
      %p172 = scmp.ne.s32.totalorder %s164, %s166
      %p173 = scmp.eq.s32.totalorder %s30, 1
      %p174 = por %p172, %p173
      %p175 = scmp.ne.s32.totalorder %s166, %s167
      %p176 = scmp.eq.s32.totalorder %s30, 0
      %p177 = por %p175, %p176
      %p178 = scmp.ne.s32.totalorder %s166, %s167
      %p179 = scmp.eq.s32.totalorder %s31, 1
      %p180 = por %p178, %p179
      %p182 = scmp.ne.s32.totalorder %s167, %s181
      %p183 = scmp.eq.s32.totalorder %s31, 0
      %p184 = por %p182, %p183
      %s185 = ssub.s32 %s25, %s32
      %p186 = scmp.eq.s32.totalorder %s185, 0
      %s188 = sadd.s32 %s187, 1
      %s189 = scalar_select %p186, %s187, %s188
      %p192 = pneg %p186
      %p193 = scmp.eq.s32.totalorder %s25, 1
      %p194 = por %p192, %p193
      %p195 = scmp.ne.s32.totalorder %s187, %s190
      %p196 = scmp.eq.s32.totalorder %s25, 0
      %p197 = por %p195, %p196
      %p198 = scmp.ne.s32.totalorder %s187, %s190
      %p199 = scmp.eq.s32.totalorder %s30, 1
      %p200 = por %p198, %p199
      %p201 = scmp.ne.s32.totalorder %s190, %s191
      %p202 = scmp.eq.s32.totalorder %s30, 0
      %p203 = por %p201, %p202
      %p204 = scmp.ne.s32.totalorder %s190, %s191
      %p205 = scmp.eq.s32.totalorder %s31, 1
      %p206 = por %p204, %p205
      %p208 = scmp.ne.s32.totalorder %s191, %s207
      %p209 = scmp.eq.s32.totalorder %s31, 0
      %p210 = por %p208, %p209
      %s211 = ssub.s32 %s25, %s32
      %p212 = scmp.eq.s32.totalorder %s211, 0
      %s214 = sadd.s32 %s213, 1
      %s215 = scalar_select %p212, %s213, %s214
      %p218 = pneg %p212
      %p219 = scmp.eq.s32.totalorder %s25, 1
      %p220 = por %p218, %p219
      %p221 = scmp.ne.s32.totalorder %s213, %s216
      %p222 = scmp.eq.s32.totalorder %s25, 0
      %p223 = por %p221, %p222
      %p224 = scmp.ne.s32.totalorder %s213, %s216
      %p225 = scmp.eq.s32.totalorder %s30, 1
      %p226 = por %p224, %p225
      %p227 = scmp.ne.s32.totalorder %s216, %s217
      %p228 = scmp.eq.s32.totalorder %s30, 0
      %p229 = por %p227, %p228
      %p230 = scmp.ne.s32.totalorder %s216, %s217
      %p231 = scmp.eq.s32.totalorder %s31, 1
      %p232 = por %p230, %p231
      %p234 = scmp.ne.s32.totalorder %s217, %s233
      %p235 = scmp.eq.s32.totalorder %s31, 0
      %p236 = por %p234, %p235
      %p237 = scmp.le.s32.totalorder 1, %s25
      %p238 = scmp.lt.s32.totalorder %s25, 3
      %p239 = pnand %p237, %p238
      %p240 = pneg %p239
      // Predicated region
      $region9: #{tpu_custom_call.1} parent=5 // pred_check
        _
      $region10: #{tpu_custom_call.1} parent=5 // pred_check_branch
        %242 = sbr.rel (%p239) target = $region12
      $region11: #{tpu_custom_call.1} parent=5 // pred_region
        %s243 = ssub.s32 %s25, 1
        // Predicated region
        $region13: #{tpu_custom_call.1} parent=11 // pred_check
          %p244 = pneg %p72
        $region14: #{tpu_custom_call.1} parent=11 // pred_check_branch
          %246 = sbr.rel (%p244) target = $region16
        $region15: #{tpu_custom_call.1} parent=11 // pred_region
          %s248 = ssub.s32 1024, 1024
          %249 = vsyncadd [#allocation6], %s248
          %s250 = sshll.u32 [#allocation5], 4
          %s251 = int_to_ptr.vmem [resolvable:$true] %s250
          %256 = dma.hbm_to_vmem [thread:$0]  %s1, 1024, %s251, [#allocation6], 64, 64, 4
        $region16: #{tpu_custom_call.1} parent=11 // pred_fallthru
          _
        // Predicated region
        $region17: #{tpu_custom_call.1} parent=11 // pred_check
          %p257 = pneg %p93
        $region18: #{tpu_custom_call.1} parent=11 // pred_check_branch
          %259 = sbr.rel (%p257) target = $region20
        $region19: #{tpu_custom_call.1} parent=11 // pred_region
          _
        $region20: #{tpu_custom_call.1} parent=11 // pred_fallthru
          _
        // Predicated region
        $region21: #{tpu_custom_call.1} parent=11 // pred_check
          %p260 = pneg %p114
        $region22: #{tpu_custom_call.1} parent=11 // pred_check_branch
          %262 = sbr.rel (%p260) target = $region24
        $region23: #{tpu_custom_call.1} parent=11 // pred_region
          _
        $region24: #{tpu_custom_call.1} parent=11 // pred_fallthru
          _
        // Predicated region
        $region25: #{tpu_custom_call.1} parent=11 // pred_check
          %p263 = pneg %p135
        $region26: #{tpu_custom_call.1} parent=11 // pred_check_branch
          %265 = sbr.rel (%p263) target = $region28
        $region27: #{tpu_custom_call.1} parent=11 // pred_region
          _
        $region28: #{tpu_custom_call.1} parent=11 // pred_fallthru
          _
        // Predicated region
        $region29: #{tpu_custom_call.1} parent=11 // pred_check
          %p266 = pneg %p156
        $region30: #{tpu_custom_call.1} parent=11 // pred_check_branch
          %268 = sbr.rel (%p266) target = $region32
        $region31: #{tpu_custom_call.1} parent=11 // pred_region
          %s270 = ssub.s32 2048, 2048
          %271 = vsyncadd [#allocation6], %s270
          %s272 = sshll.u32 [#allocation7], 4
          %s273 = int_to_ptr.vmem [resolvable:$true] %s272
          %278 = dma.hbm_to_vmem [thread:$0]  %s5, 2048, %s273, [#allocation6], 128, 128, 8
        $region32: #{tpu_custom_call.1} parent=11 // pred_fallthru
          _
        // Predicated region
        $region33: #{tpu_custom_call.1} parent=11 // pred_check
          %p279 = pneg %p177
        $region34: #{tpu_custom_call.1} parent=11 // pred_check_branch
          %281 = sbr.rel (%p279) target = $region36
        $region35: #{tpu_custom_call.1} parent=11 // pred_region
          _
        $region36: #{tpu_custom_call.1} parent=11 // pred_fallthru
          _
      $region12: #{tpu_custom_call.1} parent=5 // pred_fallthru
        _
      %p282 = scmp.lt.s32.totalorder %s25, 2
      // Predicated region
      $region37: #{tpu_custom_call.1} parent=5 // pred_check
        %p283 = pneg %p282
      $region38: #{tpu_custom_call.1} parent=5 // pred_check_branch
        %285 = sbr.rel (%p283) target = $region40
      $region39: #{tpu_custom_call.1} parent=5 // pred_region
        // Predicated region
        $region41: #{tpu_custom_call.1} parent=39 // pred_check
          %p286 = pneg %p45
        $region42: #{tpu_custom_call.1} parent=39 // pred_check_branch
          %288 = sbr.rel (%p286) target = $region44
        $region43: #{tpu_custom_call.1} parent=39 // pred_region
          %s289 = sand.u32 %s35, 1
          %s290 = scalar_lea.sflag [#allocation3], %s289
          %s291 = sand.u32 %s35, 1
          %s292 = smul.addr %s291, 4
          %s293 = scalar_lea.vmem [#allocation2], %s292
          %s295 = ssub.s32 64, 64
          %296 = vsyncadd %s290, %s295
          %s297 = smul.addr %s25, 64
          %s298 = scalar_lea.hbm %s0, %s297
          %s300 = sshll.u32 %s293, 4
          %s301 = int_to_ptr.vmem [resolvable:$true] %s300
          %303 = dma.hbm_to_vmem [thread:$0]  %s298, 64, %s301, %s290
        $region44: #{tpu_custom_call.1} parent=39 // pred_fallthru
          _
      $region40: #{tpu_custom_call.1} parent=5 // pred_fallthru
        _
      %p304 = scmp.le.s32.totalorder 1, %s25
      %p305 = scmp.lt.s32.totalorder %s25, 3
      %p306 = pnand %p304, %p305
      %p307 = pneg %p306
      // Predicated region
      $region45: #{tpu_custom_call.1} parent=5 // pred_check
        _
      $region46: #{tpu_custom_call.1} parent=5 // pred_check_branch
        %309 = sbr.rel (%p306) target = $region48
      $region47: #{tpu_custom_call.1} parent=5 // pred_region
        %s310 = ssub.s32 %s25, 1
        %s311 = sand.u32 %s38, 1
        %s312 = scalar_lea.sflag [#allocation3], %s311
        %s313 = sand.u32 %s38, 1
        %s314 = smul.addr %s313, 4
        %s315 = scalar_lea.vmem [#allocation2], %s314
        // Predicated region
        $region49: #{tpu_custom_call.1} parent=47 // pred_check
          %p316 = pneg %p51
        $region50: #{tpu_custom_call.1} parent=47 // pred_check_branch
          %318 = sbr.rel (%p316) target = $region52
        $region51: #{tpu_custom_call.1} parent=47 // pred_region
          %319 = dma.done %s312, 64
        $region52: #{tpu_custom_call.1} parent=47 // pred_fallthru
          _
        // Predicated region
        $region53: #{tpu_custom_call.1} parent=47 // pred_check
          %p320 = pneg %p72
        $region54: #{tpu_custom_call.1} parent=47 // pred_check_branch
          %322 = sbr.rel (%p320) target = $region56
        $region55: #{tpu_custom_call.1} parent=47 // pred_region
          %323 = dma.done [#allocation6], 1024
        $region56: #{tpu_custom_call.1} parent=47 // pred_fallthru
          _
        // Predicated region
        $region57: #{tpu_custom_call.1} parent=47 // pred_check
          %p324 = pneg %p156
        $region58: #{tpu_custom_call.1} parent=47 // pred_check_branch
          %326 = sbr.rel (%p324) target = $region60
        $region59: #{tpu_custom_call.1} parent=47 // pred_region
          %327 = dma.done [#allocation6], 2048
        $region60: #{tpu_custom_call.1} parent=47 // pred_fallthru
          _
        %s328 = sand.u32 %s38, 1
        %s329 = scalar_lea.sflag [#allocation3], %s328
        %s330 = sand.u32 %s38, 1
        %s331 = smul.addr %s330, 4
        %s332 = scalar_lea.vmem [#allocation2], %s331
        %p333 = pneg %p51
        %p334 = pneg %p48
        %p335 = pneg %p72
        %p336 = pneg %p69
        %p337 = pneg %p93
        %p338 = pneg %p90
        %p339 = pneg %p114
        %p340 = pneg %p111
        %p341 = pneg %p135
        %p342 = pneg %p132
        %p343 = pneg %p156
        %p344 = pneg %p153
        %p345 = pneg %p177
        %p346 = pneg %p174
        %p347 = pneg %p203
        %p348 = pneg %p200
        %s349 = sand.u32 %s190, 1
        %s350 = scalar_lea.sflag [#allocation4], %s349
        %s351 = sand.u32 %s190, 1
        %s352 = smul.addr %s351, 8
        %s353 = scalar_lea.vmem [#allocation8], %s352
        %p354 = pneg %p229
        %p355 = pneg %p226
        %s356 = sand.u32 %s216, 1
        %s357 = scalar_lea.sflag [#allocation10], %s356
        %s358 = sand.u32 %s216, 1
        %s359 = smul.addr %s358, 8
        %s360 = scalar_lea.vmem [#allocation9], %s359
        %v362 = vld [vmem:[%s315] sm:$0xf]
        %v363 = vld [vmem:[#allocation5] sm:$0xf]
        %v364 = vld [vmem:[#allocation5 + $0x4] sm:$0xf]
        %v365 = vld [vmem:[#allocation5 + $0x8] sm:$0xf]
        %v366 = vld [vmem:[#allocation5 + $0xc] sm:$0xf]
        %v367 = vld [vmem:[#allocation5 + $0x10] sm:$0xf]
        %v368 = vld [vmem:[#allocation5 + $0x14] sm:$0xf]
        %v369 = vld [vmem:[#allocation5 + $0x18] sm:$0xf]
        %v370 = vld [vmem:[#allocation5 + $0x1c] sm:$0xf]
        %v371 = vld [vmem:[#allocation5 + $0x20] sm:$0xf]
        %v372 = vld [vmem:[#allocation5 + $0x24] sm:$0xf]
        %v373 = vld [vmem:[#allocation5 + $0x28] sm:$0xf]
        %v374 = vld [vmem:[#allocation5 + $0x2c] sm:$0xf]
        %v375 = vld [vmem:[#allocation5 + $0x30] sm:$0xf]
        %v376 = vld [vmem:[#allocation5 + $0x34] sm:$0xf]
        %v377 = vld [vmem:[#allocation5 + $0x38] sm:$0xf]
        %v378 = vld [vmem:[#allocation5 + $0x3c] sm:$0xf]
        %v379 = vld [vmem:[%s2] sm:$0x1]
        %v381 = vlaneseq
        %v382 = vshrl.u32 %v381, 7
        %v383 = vsub.s32 0, %v382
        %v384 = vrot.slane %v379, %v383
        %v402 = vunpack.c.l.b16 %v363
        %v403 = vunpack.c.l.b16 %v364
        %v404 = vunpack.c.l.b16 %v365
        %v405 = vunpack.c.l.b16 %v366
        %v406 = vunpack.c.l.b16 %v367
        %v407 = vunpack.c.l.b16 %v368
        %v408 = vunpack.c.l.b16 %v369
        %v409 = vunpack.c.l.b16 %v370
        %v410 = vunpack.c.l.b16 %v371
        %v411 = vunpack.c.l.b16 %v372
        %v412 = vunpack.c.l.b16 %v373
        %v413 = vunpack.c.l.b16 %v374
        %v414 = vunpack.c.l.b16 %v375
        %v415 = vunpack.c.l.b16 %v376
        %v416 = vunpack.c.l.b16 %v377
        %v417 = vunpack.c.l.b16 %v378
        %v418 = vpack.c.b16 %v403, %v402
        %v419 = vpack.c.b16 %v405, %v404
        %v420 = vpack.c.b16 %v407, %v406
        %v421 = vpack.c.b16 %v409, %v408
        %v422 = vpack.c.b16 %v411, %v410
        %v423 = vpack.c.b16 %v413, %v412
        %v424 = vpack.c.b16 %v415, %v414
        %v425 = vpack.c.b16 %v417, %v416
        %434 = vmatprep.subr.bf16.mxu0 0
        %435 = vmatpush1.bf16.msra.mxu0 %v425
        %436 = vmatprep.subr.bf16.mxu0 0
        %437 = vmatpush1.bf16.msra.mxu0 %v424
        %438 = vmatprep.subr.bf16.mxu0 0
        %439 = vmatpush1.bf16.msra.mxu0 %v423
        %440 = vmatprep.subr.bf16.mxu0 0
        %441 = vmatpush1.bf16.msra.mxu0 %v422
        %442 = vmatprep.subr.bf16.mxu0 0
        %443 = vmatpush1.bf16.msra.mxu0 %v421
        %444 = vmatprep.subr.bf16.mxu0 0
        %445 = vmatpush1.bf16.msra.mxu0 %v420
        %446 = vmatprep.subr.bf16.mxu0 0
        %447 = vmatpush1.bf16.msra.mxu0 %v419
        %448 = vmatprep.subr.bf16.mxu0 0
        %449 = vmatpush1.bf16.msra.mxu0 %v418
        %450 = vmatprep.subr.bf16.mxu0 0
        %451 = vmatpush2.bf16.msra.mxu0 0
        %452 = vmatprep.subr.bf16.mxu0 0
        %453 = vmatpush2.bf16.msra.mxu0 0
        %454 = vmatprep.subr.bf16.mxu0 0
        %455 = vmatpush2.bf16.msra.mxu0 0
        %456 = vmatprep.subr.bf16.mxu0 0
        %457 = vmatpush2.bf16.msra.mxu0 0
        %458 = vmatprep.subr.bf16.mxu0 0
        %459 = vmatpush2.bf16.msra.mxu0 0
        %460 = vmatprep.subr.bf16.mxu0 0
        %461 = vmatpush2.bf16.msra.mxu0 0
        %462 = vmatprep.subr.bf16.mxu0 0
        %463 = vmatpush2.bf16.msra.mxu0 0
        %464 = vmatprep.subr.bf16.mxu0 0
        %465 = vmatpush2.bf16.msra.mxu0 0
        %466 = vmatprep.mubr.bf16.mxu0 0
        %467 = vmatmul.mubr.bf16.gmra.mxu0 %v362
        %v468 = vpop.f32.mrf.mxu0
        %v469 = vadd.f32 %v384, %v468
        %v470 = vpop.f32.mrf.mxu0
        %v471 = vpop.f32.mrf.mxu0
        %v472 = vpop.f32.mrf.mxu0
        %473 = vdwg.mxu0
        %474 = vadd.xlane.f32.xlu0 %v469
        %v475 = vpop.xlane.xlu0 %474
        %v476 = vmul.f32 %v475, 0.03125
        %v477 = vsub.f32 %v469, %v476
        %v478 = vlaneseq
        %v479 = vand.u32 %v478, 127
        %vm480 = vcmp.lt.s32.totalorder %v479, 32
        %v481 = vsel %vm480, 1, 0
        %vm482 = vcmp.eq.s32.totalorder %v481, 1
        %v483 = vsel %vm482, %v477, 0.0
        %v484 = vmul.f32 %v483, %v483
        %485 = vadd.xlane.f32.xlu0 %v484
        %v486 = vpop.xlane.xlu0 %485
        %v487 = vmul.f32 %v486, 0.03125
        %v488 = vadd.f32 %v487, 1e-05
        %v489 = vrsqrt.pop %v488
        %v490 = vmul.f32 %v477, %v489
        %v491 = vld [vmem:[%s3] sm:$0x1]
        %v493 = vlaneseq
        %v494 = vshrl.u32 %v493, 7
        %v495 = vsub.s32 0, %v494
        %v496 = vrot.slane %v491, %v495
        %v498 = vmul.f32 %v490, %v496
        %v499 = vld [vmem:[%s4] sm:$0x1]
        %v501 = vlaneseq
        %v502 = vshrl.u32 %v501, 7
        %v503 = vsub.s32 0, %v502
        %v504 = vrot.slane %v499, %v503
        %v506 = vadd.f32 %v498, %v504
        %v507 = vmax.f32 %v506, 0.0
        %v508 = vpack.c.bf16 %v507, %v507
        %v509 = vld [vmem:[#allocation7] sm:$0xff]
        %v510 = vld [vmem:[#allocation7 + $0x8] sm:$0xff]
        %v511 = vld [vmem:[#allocation7 + $0x10] sm:$0xff]
        %v512 = vld [vmem:[#allocation7 + $0x18] sm:$0xff]
        %v513 = vld [vmem:[#allocation7 + $0x20] sm:$0xff]
        %v514 = vld [vmem:[#allocation7 + $0x28] sm:$0xff]
        %v515 = vld [vmem:[#allocation7 + $0x30] sm:$0xff]
        %v516 = vld [vmem:[#allocation7 + $0x38] sm:$0xff]
        %v517 = vld [vmem:[#allocation7 + $0x40] sm:$0xff]
        %v518 = vld [vmem:[#allocation7 + $0x48] sm:$0xff]
        %v519 = vld [vmem:[#allocation7 + $0x50] sm:$0xff]
        %v520 = vld [vmem:[#allocation7 + $0x58] sm:$0xff]
        %v521 = vld [vmem:[#allocation7 + $0x60] sm:$0xff]
        %v522 = vld [vmem:[#allocation7 + $0x68] sm:$0xff]
        %v523 = vld [vmem:[#allocation7 + $0x70] sm:$0xff]
        %v524 = vld [vmem:[#allocation7 + $0x78] sm:$0xff]
        %v525 = vld [vmem:[%s6] sm:$0x3]
        %v527 = vlaneseq
        %v528 = vshrl.u32 %v527, 7
        %v529 = vsub.s32 0, %v528
        %v530 = vrot.slane %v525, %v529
        %v531 = vlaneseq
        %v532 = vshrl.u32 %v531, 7
        %v533 = vsub.s32 1, %v532
        %v534 = vrot.slane %v525, %v533
        %v553 = vunpack.c.l.b16 %v509
        %v554 = vunpack.c.h.b16 %v509
        %v555 = vunpack.c.l.b16 %v510
        %v556 = vunpack.c.h.b16 %v510
        %v557 = vunpack.c.l.b16 %v511
        %v558 = vunpack.c.h.b16 %v511
        %v559 = vunpack.c.l.b16 %v512
        %v560 = vunpack.c.h.b16 %v512
        %v561 = vunpack.c.l.b16 %v513
        %v562 = vunpack.c.h.b16 %v513
        %v563 = vunpack.c.l.b16 %v514
        %v564 = vunpack.c.h.b16 %v514
        %v565 = vunpack.c.l.b16 %v515
        %v566 = vunpack.c.h.b16 %v515
        %v567 = vunpack.c.l.b16 %v516
        %v568 = vunpack.c.h.b16 %v516
        %v569 = vunpack.c.l.b16 %v517
        %v570 = vunpack.c.h.b16 %v517
        %v571 = vunpack.c.l.b16 %v518
        %v572 = vunpack.c.h.b16 %v518
        %v573 = vunpack.c.l.b16 %v519
        %v574 = vunpack.c.h.b16 %v519
        %v575 = vunpack.c.l.b16 %v520
        %v576 = vunpack.c.h.b16 %v520
        %v577 = vunpack.c.l.b16 %v521
        %v578 = vunpack.c.h.b16 %v521
        %v579 = vunpack.c.l.b16 %v522
        %v580 = vunpack.c.h.b16 %v522
        %v581 = vunpack.c.l.b16 %v523
        %v582 = vunpack.c.h.b16 %v523
        %v583 = vunpack.c.l.b16 %v524
        %v584 = vunpack.c.h.b16 %v524
        %v585 = vpack.c.b16 %v555, %v553
        %v586 = vpack.c.b16 %v556, %v554
        %v587 = vpack.c.b16 %v559, %v557
        %v588 = vpack.c.b16 %v560, %v558
        %v589 = vpack.c.b16 %v563, %v561
        %v590 = vpack.c.b16 %v564, %v562
        %v591 = vpack.c.b16 %v567, %v565
        %v592 = vpack.c.b16 %v568, %v566
        %v593 = vpack.c.b16 %v571, %v569
        %v594 = vpack.c.b16 %v572, %v570
        %v595 = vpack.c.b16 %v575, %v573
        %v596 = vpack.c.b16 %v576, %v574
        %v597 = vpack.c.b16 %v579, %v577
        %v598 = vpack.c.b16 %v580, %v578
        %v599 = vpack.c.b16 %v583, %v581
        %v600 = vpack.c.b16 %v584, %v582
        %617 = vmatprep.subr.bf16.mxu0 %v600
        %618 = vmatpush1.bf16.msra.mxu0 %v599
        %619 = vmatprep.subr.bf16.mxu0 %v598
        %620 = vmatpush1.bf16.msra.mxu0 %v597
        %621 = vmatprep.subr.bf16.mxu0 %v596
        %622 = vmatpush1.bf16.msra.mxu0 %v595
        %623 = vmatprep.subr.bf16.mxu0 %v594
        %624 = vmatpush1.bf16.msra.mxu0 %v593
        %625 = vmatprep.subr.bf16.mxu0 %v592
        %626 = vmatpush1.bf16.msra.mxu0 %v591
        %627 = vmatprep.subr.bf16.mxu0 %v590
        %628 = vmatpush1.bf16.msra.mxu0 %v589
        %629 = vmatprep.subr.bf16.mxu0 %v588
        %630 = vmatpush1.bf16.msra.mxu0 %v587
        %631 = vmatprep.subr.bf16.mxu0 %v586
        %632 = vmatpush1.bf16.msra.mxu0 %v585
        %633 = vmatprep.subr.bf16.mxu0 0
        %634 = vmatpush2.bf16.msra.mxu0 0
        %635 = vmatprep.subr.bf16.mxu0 0
        %636 = vmatpush2.bf16.msra.mxu0 0
        %637 = vmatprep.subr.bf16.mxu0 0
        %638 = vmatpush2.bf16.msra.mxu0 0
        %639 = vmatprep.subr.bf16.mxu0 0
        %640 = vmatpush2.bf16.msra.mxu0 0
        %641 = vmatprep.subr.bf16.mxu0 0
        %642 = vmatpush2.bf16.msra.mxu0 0
        %643 = vmatprep.subr.bf16.mxu0 0
        %644 = vmatpush2.bf16.msra.mxu0 0
        %645 = vmatprep.subr.bf16.mxu0 0
        %646 = vmatpush2.bf16.msra.mxu0 0
        %647 = vmatprep.subr.bf16.mxu0 0
        %648 = vmatpush2.bf16.msra.mxu0 0
        %649 = vmatprep.mubr.bf16.mxu0 0
        %650 = vmatmul.mubr.bf16.gmra.mxu0 %v508
        %v651 = vpop.f32.mrf.mxu0
        %v652 = vadd.f32 %v530, %v651
        %v653 = vpop.f32.mrf.mxu0
        %v654 = vadd.f32 %v534, %v653
        %v655 = vpop.f32.mrf.mxu0
        %v656 = vpop.f32.mrf.mxu0
        %657 = vdwg.mxu0
        %658 = vst [vmem:[%s353] sm:$0xff] %v652
        %v659 = vtanh.pop %v654
        %v660 = vmul.f32 %v659, 4.99995
        %v661 = vadd.f32 %v660, 5.00005
        %662 = vst [vmem:[%s360] sm:$0xff] %v661
        %s663 = sand.u32 %s190, 1
        %s664 = scalar_lea.sflag [#allocation4], %s663
        %s665 = sand.u32 %s190, 1
        %s666 = smul.addr %s665, 8
        %s667 = scalar_lea.vmem [#allocation8], %s666
        %s668 = sand.u32 %s216, 1
        %s669 = scalar_lea.sflag [#allocation10], %s668
        %s670 = sand.u32 %s216, 1
        %s671 = smul.addr %s670, 8
        %s672 = scalar_lea.vmem [#allocation9], %s671
        // Predicated region
        $region61: #{tpu_custom_call.1} parent=47 // pred_check
          %p673 = pneg %p200
        $region62: #{tpu_custom_call.1} parent=47 // pred_check_branch
          %675 = sbr.rel (%p673) target = $region64
        $region63: #{tpu_custom_call.1} parent=47 // pred_region
          %s677 = ssub.s32 128, 128
          %678 = vsyncadd %s664, %s677
          %s679 = smul.addr %s30, 128
          %s680 = scalar_lea.hbm %s7, %s679
          %s682 = sshll.u32 %s667, 4
          %s683 = int_to_ptr.vmem [resolvable:$true] %s682
          %685 = dma.vmem_to_hbm [thread:$0]  %s683, 128, %s680, %s664
        $region64: #{tpu_custom_call.1} parent=47 // pred_fallthru
          _
        // Predicated region
        $region65: #{tpu_custom_call.1} parent=47 // pred_check
          %p686 = pneg %p226
        $region66: #{tpu_custom_call.1} parent=47 // pred_check_branch
          %688 = sbr.rel (%p686) target = $region68
        $region67: #{tpu_custom_call.1} parent=47 // pred_region
          %s690 = ssub.s32 128, 128
          %691 = vsyncadd %s669, %s690
          %s692 = smul.addr %s30, 128
          %s693 = scalar_lea.hbm %s8, %s692
          %s695 = sshll.u32 %s672, 4
          %s696 = int_to_ptr.vmem [resolvable:$true] %s695
          %698 = dma.vmem_to_hbm [thread:$0]  %s696, 128, %s693, %s669
        $region68: #{tpu_custom_call.1} parent=47 // pred_fallthru
          _
      $region48: #{tpu_custom_call.1} parent=5 // pred_fallthru
        _
      %p699 = scmp.le.s32.totalorder 2, %s25
      // Predicated region
      $region69: #{tpu_custom_call.1} parent=5 // pred_check
        %p700 = pneg %p699
      $region70: #{tpu_custom_call.1} parent=5 // pred_check_branch
        %702 = sbr.rel (%p700) target = $region72
      $region71: #{tpu_custom_call.1} parent=5 // pred_region
        %s703 = ssub.s32 %s25, 2
        // Predicated region
        $region73: #{tpu_custom_call.1} parent=71 // pred_check
          %p704 = pneg %p206
        $region74: #{tpu_custom_call.1} parent=71 // pred_check_branch
          %706 = sbr.rel (%p704) target = $region76
        $region75: #{tpu_custom_call.1} parent=71 // pred_region
          %s707 = sand.u32 %s191, 1
          %s708 = scalar_lea.sflag [#allocation4], %s707
          %s709 = sand.u32 %s191, 1
          %s710 = smul.addr %s709, 8
          %s711 = scalar_lea.vmem [#allocation8], %s710
          %712 = dma.done %s708, 128
        $region76: #{tpu_custom_call.1} parent=71 // pred_fallthru
          _
        // Predicated region
        $region77: #{tpu_custom_call.1} parent=71 // pred_check
          %p713 = pneg %p232
        $region78: #{tpu_custom_call.1} parent=71 // pred_check_branch
          %715 = sbr.rel (%p713) target = $region80
        $region79: #{tpu_custom_call.1} parent=71 // pred_region
          %s716 = sand.u32 %s217, 1
          %s717 = scalar_lea.sflag [#allocation10], %s716
          %s718 = sand.u32 %s217, 1
          %s719 = smul.addr %s718, 8
          %s720 = scalar_lea.vmem [#allocation9], %s719
          %721 = dma.done %s717, 128
        $region80: #{tpu_custom_call.1} parent=71 // pred_fallthru
          _
      $region72: #{tpu_custom_call.1} parent=5 // pred_fallthru
        _
    $region6: #{tpu_custom_call.1} parent=1 // loop_footer
      %s29 = sadd.s32 1, %s25
    $region7: #{tpu_custom_call.1} parent=1 // loop_footer_branch
      %24 = sbr.rel target = $region3
    $region8: #{tpu_custom_call.1} parent=1 // loop_exit
      _
    %722 = vsyncpa [#allocation3], 1
    %s723 = scalar_lea.sflag [#allocation3], 1
    %724 = vsyncpa %s723, 1
    %725 = vsyncpa [#allocation6], 1
    %726 = vsyncpa [#allocation4], 1
    %s727 = scalar_lea.sflag [#allocation4], 1
    %728 = vsyncpa %s727, 1
    %729 = vsyncpa [#allocation10], 1
    %s730 = scalar_lea.sflag [#allocation10], 1
    %731 = vsyncpa %s730, 1

// kernel: tpu_custom_call.1
$region0: #{tpu_custom_call.1}
  #allocation0 [shape = 'u32[]', space=smem, size = 0x4, offset = 0x4, fixed_abs, tag = 'smem constant byte address 0x4 - core index']
  #allocation1 [shape = 'u32[144,128]{1,0:T(1,128)}', space=vmem, size = 0x12000, scoped, tag = 'internal scratch']
  %s0 = inlined_call_operand.hbm [shape: bf16[16,128], index: 0, kind: input, shape index: {}]
  %s1 = inlined_call_operand.hbm [shape: bf16[128,128], index: 1, kind: input, shape index: {}]
  %s2 = inlined_call_operand.vmem [shape: f32[1,128], index: 2, kind: input, shape index: {}]
  %s3 = inlined_call_operand.vmem [shape: f32[1,128], index: 3, kind: input, shape index: {}]
  %s4 = inlined_call_operand.vmem [shape: f32[1,128], index: 4, kind: input, shape index: {}]
  %s5 = inlined_call_operand.hbm [shape: bf16[128,256], index: 5, kind: input, shape index: {}]
  %s6 = inlined_call_operand.vmem [shape: f32[1,256], index: 6, kind: input, shape index: {}]
  %s7 = inlined_call_operand.hbm [shape: f32[16,128], index: 7, kind: output, shape index: {0}]
  %s8 = inlined_call_operand.hbm [shape: f32[16,128], index: 8, kind: output, shape index: {1}]
  %9 = xla_tuple %s7, %s8
  %s10 = sld [smem:[#allocation0]]
  $region81: #{tpu_custom_call.1} parent=0
    _
  %s12 = ssub.s32 1, %s10
  %s13 = scalar_select 0, %s12, %s10
  $region1: #{tpu_custom_call.1} parent=0
    #allocation2 [shape = 'u8[4096]{0}', space=vmem, size = 0x1000, scoped, tag = 'input window, operand 0']
    #allocation3 [shape = 's32[2]{0}', space=sflag, size = 0x8, scoped, tag = 'scoped memory for tpu_custom_call.1']
    #allocation4 [shape = 's32[2]{0}', space=sflag, size = 0x8, scoped, tag = 'scoped memory for tpu_custom_call.1']
    #allocation5 [shape = 'u8[32768]{0}', space=vmem, size = 0x8000, scoped, tag = 'input window, operand 1, single buffered']
    #allocation6 [shape = 's32[1]{0}', space=sflag, size = 0x4, scoped, tag = 'scoped memory for tpu_custom_call.1']
    #allocation7 [shape = 'u8[65536]{0}', space=vmem, size = 0x10000, scoped, tag = 'input window, operand 5, single buffered']
    #allocation8 [shape = 'u8[8192]{0}', space=vmem, size = 0x2000, scoped, tag = 'output window, operand 0']
    #allocation9 [shape = 'u8[8192]{0}', space=vmem, size = 0x2000, scoped, tag = 'output window, operand 1']
    #allocation10 [shape = 's32[2]{0}', space=sflag, size = 0x8, scoped, tag = 'scoped memory for tpu_custom_call.1']
    %14 = vsyncpa [#allocation3], 0
    %s15 = scalar_lea.sflag [#allocation3], 1
    %16 = vsyncpa %s15, 0
    %17 = vsyncpa [#allocation6], 0
    %18 = vsyncpa [#allocation4], 0
    %s19 = scalar_lea.sflag [#allocation4], 1
    %20 = vsyncpa %s19, 0
    %21 = vsyncpa [#allocation10], 0
    %s22 = scalar_lea.sflag [#allocation10], 1
    %23 = vsyncpa %s22, 0
    loop: start=0, step=1, limit=4
    $region2: #{tpu_custom_call.1} parent=1 // loop_pre_header
      _
    $region3: #{tpu_custom_call.1} parent=1 // loop_header
      %s25 = sphi 0, %s29
      %p26 = scmp.ge.s32.totalorder %s25, 4
      %s35 = sphi 0, %s37
      %s38 = sphi 0, %s35
      %s39 = sphi 0, %s38
      %s55 = sphi 0, %s39
      %s59 = sphi 0, %s59
      %s61 = sphi 0, %s59
      %s62 = sphi 0, %s61
      %s76 = sphi 0, %s62
      %s80 = sphi 0, %s80
      %s82 = sphi 0, %s80
      %s83 = sphi 0, %s82
      %s97 = sphi 0, %s83
      %s101 = sphi 0, %s101
      %s103 = sphi 0, %s101
      %s104 = sphi 0, %s103
      %s118 = sphi 0, %s104
      %s122 = sphi 0, %s122
      %s124 = sphi 0, %s122
      %s125 = sphi 0, %s124
      %s139 = sphi 0, %s125
      %s143 = sphi 0, %s143
      %s145 = sphi 0, %s143
      %s146 = sphi 0, %s145
      %s160 = sphi 0, %s146
      %s164 = sphi 0, %s164
      %s166 = sphi 0, %s164
      %s167 = sphi 0, %s166
      %s181 = sphi 0, %s167
      %s187 = sphi 0, %s189
      %s190 = sphi 0, %s187
      %s191 = sphi 0, %s190
      %s207 = sphi 0, %s191
      %s213 = sphi 0, %s215
      %s216 = sphi 0, %s213
      %s217 = sphi 0, %s216
      %s233 = sphi 0, %s217
    $region4: #{tpu_custom_call.1} parent=1 // loop_header_branch
      %28 = sbr.rel (%p26) target = $region8
    $region5: #{tpu_custom_call.1} parent=1 // loop_body
      %s30 = ssub.s32 %s25, 1
      %s31 = ssub.s32 %s25, 2
      %s32 = sadd.s32 %s25, 1
      %s33 = ssub.s32 %s25, %s32
      %p34 = scmp.eq.s32.totalorder %s33, 0
      %s36 = sadd.s32 %s35, 1
      %s37 = scalar_select %p34, %s35, %s36
      %p40 = pneg %p34
      %p41 = scmp.eq.s32.totalorder %s25, 1
      %p42 = por %p40, %p41
      %p43 = scmp.ne.s32.totalorder %s35, %s38
      %p44 = scmp.eq.s32.totalorder %s25, 0
      %p45 = por %p43, %p44
      %p46 = scmp.ne.s32.totalorder %s35, %s38
      %p47 = scmp.eq.s32.totalorder %s30, 1
      %p48 = por %p46, %p47
      %p49 = scmp.ne.s32.totalorder %s38, %s39
      %p50 = scmp.eq.s32.totalorder %s30, 0
      %p51 = por %p49, %p50
      %p52 = scmp.ne.s32.totalorder %s38, %s39
      %p53 = scmp.eq.s32.totalorder %s31, 1
      %p54 = por %p52, %p53
      %p56 = scmp.ne.s32.totalorder %s39, %s55
      %p57 = scmp.eq.s32.totalorder %s31, 0
      %p58 = por %p56, %p57
      %s60 = sadd.s32 %s59, 1
      %p63 = scmp.eq.s32.totalorder %s25, 1
      %p64 = scmp.ne.s32.totalorder %s59, %s61
      %p65 = scmp.eq.s32.totalorder %s25, 0
      %p66 = por %p64, %p65
      %p67 = scmp.ne.s32.totalorder %s59, %s61
      %p68 = scmp.eq.s32.totalorder %s30, 1
      %p69 = por %p67, %p68
      %p70 = scmp.ne.s32.totalorder %s61, %s62
      %p71 = scmp.eq.s32.totalorder %s30, 0
      %p72 = por %p70, %p71
      %p73 = scmp.ne.s32.totalorder %s61, %s62
      %p74 = scmp.eq.s32.totalorder %s31, 1
      %p75 = por %p73, %p74
      %p77 = scmp.ne.s32.totalorder %s62, %s76
      %p78 = scmp.eq.s32.totalorder %s31, 0
      %p79 = por %p77, %p78
      %s81 = sadd.s32 %s80, 1
      %p84 = scmp.eq.s32.totalorder %s25, 1
      %p85 = scmp.ne.s32.totalorder %s80, %s82
      %p86 = scmp.eq.s32.totalorder %s25, 0
      %p87 = por %p85, %p86
      %p88 = scmp.ne.s32.totalorder %s80, %s82
      %p89 = scmp.eq.s32.totalorder %s30, 1
      %p90 = por %p88, %p89
      %p91 = scmp.ne.s32.totalorder %s82, %s83
      %p92 = scmp.eq.s32.totalorder %s30, 0
      %p93 = por %p91, %p92
      %p94 = scmp.ne.s32.totalorder %s82, %s83
      %p95 = scmp.eq.s32.totalorder %s31, 1
      %p96 = por %p94, %p95
      %p98 = scmp.ne.s32.totalorder %s83, %s97
      %p99 = scmp.eq.s32.totalorder %s31, 0
      %p100 = por %p98, %p99
      %s102 = sadd.s32 %s101, 1
      %p105 = scmp.eq.s32.totalorder %s25, 1
      %p106 = scmp.ne.s32.totalorder %s101, %s103
      %p107 = scmp.eq.s32.totalorder %s25, 0
      %p108 = por %p106, %p107
      %p109 = scmp.ne.s32.totalorder %s101, %s103
      %p110 = scmp.eq.s32.totalorder %s30, 1
      %p111 = por %p109, %p110
      %p112 = scmp.ne.s32.totalorder %s103, %s104
      %p113 = scmp.eq.s32.totalorder %s30, 0
      %p114 = por %p112, %p113
      %p115 = scmp.ne.s32.totalorder %s103, %s104
      %p116 = scmp.eq.s32.totalorder %s31, 1
      %p117 = por %p115, %p116
      %p119 = scmp.ne.s32.totalorder %s104, %s118
      %p120 = scmp.eq.s32.totalorder %s31, 0
      %p121 = por %p119, %p120
      %s123 = sadd.s32 %s122, 1
      %p126 = scmp.eq.s32.totalorder %s25, 1
      %p127 = scmp.ne.s32.totalorder %s122, %s124
      %p128 = scmp.eq.s32.totalorder %s25, 0
      %p129 = por %p127, %p128
      %p130 = scmp.ne.s32.totalorder %s122, %s124
      %p131 = scmp.eq.s32.totalorder %s30, 1
      %p132 = por %p130, %p131
      %p133 = scmp.ne.s32.totalorder %s124, %s125
      %p134 = scmp.eq.s32.totalorder %s30, 0
      %p135 = por %p133, %p134
      %p136 = scmp.ne.s32.totalorder %s124, %s125
      %p137 = scmp.eq.s32.totalorder %s31, 1
      %p138 = por %p136, %p137
      %p140 = scmp.ne.s32.totalorder %s125, %s139
      %p141 = scmp.eq.s32.totalorder %s31, 0
      %p142 = por %p140, %p141
      %s144 = sadd.s32 %s143, 1
      %p147 = scmp.eq.s32.totalorder %s25, 1
      %p148 = scmp.ne.s32.totalorder %s143, %s145
      %p149 = scmp.eq.s32.totalorder %s25, 0
      %p150 = por %p148, %p149
      %p151 = scmp.ne.s32.totalorder %s143, %s145
      %p152 = scmp.eq.s32.totalorder %s30, 1
      %p153 = por %p151, %p152
      %p154 = scmp.ne.s32.totalorder %s145, %s146
      %p155 = scmp.eq.s32.totalorder %s30, 0
      %p156 = por %p154, %p155
      %p157 = scmp.ne.s32.totalorder %s145, %s146
      %p158 = scmp.eq.s32.totalorder %s31, 1
      %p159 = por %p157, %p158
      %p161 = scmp.ne.s32.totalorder %s146, %s160
      %p162 = scmp.eq.s32.totalorder %s31, 0
      %p163 = por %p161, %p162
      %s165 = sadd.s32 %s164, 1
      %p168 = scmp.eq.s32.totalorder %s25, 1
      %p169 = scmp.ne.s32.totalorder %s164, %s166
      %p170 = scmp.eq.s32.totalorder %s25, 0
      %p171 = por %p169, %p170
      %p172 = scmp.ne.s32.totalorder %s164, %s166
      %p173 = scmp.eq.s32.totalorder %s30, 1
      %p174 = por %p172, %p173
      %p175 = scmp.ne.s32.totalorder %s166, %s167
      %p176 = scmp.eq.s32.totalorder %s30, 0
      %p177 = por %p175, %p176
      %p178 = scmp.ne.s32.totalorder %s166, %s167
      %p179 = scmp.eq.s32.totalorder %s31, 1
      %p180 = por %p178, %p179
      %p182 = scmp.ne.s32.totalorder %s167, %s181
      %p183 = scmp.eq.s32.totalorder %s31, 0
      %p184 = por %p182, %p183
      %s185 = ssub.s32 %s25, %s32
      %p186 = scmp.eq.s32.totalorder %s185, 0
      %s188 = sadd.s32 %s187, 1
      %s189 = scalar_select %p186, %s187, %s188
      %p192 = pneg %p186
      %p193 = scmp.eq.s32.totalorder %s25, 1
      %p194 = por %p192, %p193
      %p195 = scmp.ne.s32.totalorder %s187, %s190
      %p196 = scmp.eq.s32.totalorder %s25, 0
      %p197 = por %p195, %p196
      %p198 = scmp.ne.s32.totalorder %s187, %s190
      %p199 = scmp.eq.s32.totalorder %s30, 1
      %p200 = por %p198, %p199
      %p201 = scmp.ne.s32.totalorder %s190, %s191
      %p202 = scmp.eq.s32.totalorder %s30, 0
      %p203 = por %p201, %p202
      %p204 = scmp.ne.s32.totalorder %s190, %s191
      %p205 = scmp.eq.s32.totalorder %s31, 1
      %p206 = por %p204, %p205
      %p208 = scmp.ne.s32.totalorder %s191, %s207
      %p209 = scmp.eq.s32.totalorder %s31, 0
      %p210 = por %p208, %p209
      %s211 = ssub.s32 %s25, %s32
      %p212 = scmp.eq.s32.totalorder %s211, 0
      %s214 = sadd.s32 %s213, 1
      %s215 = scalar_select %p212, %s213, %s214
      %p218 = pneg %p212
      %p219 = scmp.eq.s32.totalorder %s25, 1
      %p220 = por %p218, %p219
      %p221 = scmp.ne.s32.totalorder %s213, %s216
      %p222 = scmp.eq.s32.totalorder %s25, 0
      %p223 = por %p221, %p222
      %p224 = scmp.ne.s32.totalorder %s213, %s216
      %p225 = scmp.eq.s32.totalorder %s30, 1
      %p226 = por %p224, %p225
      %p227 = scmp.ne.s32.totalorder %s216, %s217
      %p228 = scmp.eq.s32.totalorder %s30, 0
      %p229 = por %p227, %p228
      %p230 = scmp.ne.s32.totalorder %s216, %s217
      %p231 = scmp.eq.s32.totalorder %s31, 1
      %p232 = por %p230, %p231
      %p234 = scmp.ne.s32.totalorder %s217, %s233
      %p235 = scmp.eq.s32.totalorder %s31, 0
      %p236 = por %p234, %p235
      %p237 = scmp.le.s32.totalorder 1, %s25
      %p238 = scmp.lt.s32.totalorder %s25, 3
      %p239 = pnand %p237, %p238
      %p240 = pneg %p239
      // Predicated region
      $region9: #{tpu_custom_call.1} parent=5 // pred_check
        _
      $region10: #{tpu_custom_call.1} parent=5 // pred_check_branch
        %242 = sbr.rel (%p239) target = $region12
      $region11: #{tpu_custom_call.1} parent=5 // pred_region
        %s243 = ssub.s32 %s25, 1
        // Predicated region
        $region13: #{tpu_custom_call.1} parent=11 // pred_check
          %p244 = pneg %p72
        $region14: #{tpu_custom_call.1} parent=11 // pred_check_branch
          %246 = sbr.rel (%p244) target = $region16
        $region15: #{tpu_custom_call.1} parent=11 // pred_region
          %s248 = ssub.s32 1024, 1024
          %249 = vsyncadd [#allocation6], %s248
          %s250 = sshll.u32 [#allocation5], 4
          %s251 = int_to_ptr.vmem [resolvable:$true] %s250
          %256 = dma.hbm_to_vmem [thread:$0]  %s1, 1024, %s251, [#allocation6], 64, 64, 4
        $region16: #{tpu_custom_call.1} parent=11 // pred_fallthru
          _
        // Predicated region
        $region17: #{tpu_custom_call.1} parent=11 // pred_check
          %p257 = pneg %p93
        $region18: #{tpu_custom_call.1} parent=11 // pred_check_branch
          %259 = sbr.rel (%p257) target = $region20
        $region19: #{tpu_custom_call.1} parent=11 // pred_region
          _
        $region20: #{tpu_custom_call.1} parent=11 // pred_fallthru
          _
        // Predicated region
        $region21: #{tpu_custom_call.1} parent=11 // pred_check
          %p260 = pneg %p114
        $region22: #{tpu_custom_call.1} parent=11 // pred_check_branch
          %262 = sbr.rel (%p260) target = $region24
        $region23: #{tpu_custom_call.1} parent=11 // pred_region
          _
        $region24: #{tpu_custom_call.1} parent=11 // pred_fallthru
          _
        // Predicated region
        $region25: #{tpu_custom_call.1} parent=11 // pred_check
          %p263 = pneg %p135
        $region26: #{tpu_custom_call.1} parent=11 // pred_check_branch
          %265 = sbr.rel (%p263) target = $region28
        $region27: #{tpu_custom_call.1} parent=11 // pred_region
          _
        $region28: #{tpu_custom_call.1} parent=11 // pred_fallthru
          _
        // Predicated region
        $region29: #{tpu_custom_call.1} parent=11 // pred_check
          %p266 = pneg %p156
        $region30: #{tpu_custom_call.1} parent=11 // pred_check_branch
          %268 = sbr.rel (%p266) target = $region32
        $region31: #{tpu_custom_call.1} parent=11 // pred_region
          %s270 = ssub.s32 2048, 2048
          %271 = vsyncadd [#allocation6], %s270
          %s272 = sshll.u32 [#allocation7], 4
          %s273 = int_to_ptr.vmem [resolvable:$true] %s272
          %278 = dma.hbm_to_vmem [thread:$0]  %s5, 2048, %s273, [#allocation6], 128, 128, 8
        $region32: #{tpu_custom_call.1} parent=11 // pred_fallthru
          _
        // Predicated region
        $region33: #{tpu_custom_call.1} parent=11 // pred_check
          %p279 = pneg %p177
        $region34: #{tpu_custom_call.1} parent=11 // pred_check_branch
          %281 = sbr.rel (%p279) target = $region36
        $region35: #{tpu_custom_call.1} parent=11 // pred_region
          _
        $region36: #{tpu_custom_call.1} parent=11 // pred_fallthru
          _
      $region12: #{tpu_custom_call.1} parent=5 // pred_fallthru
        _
      %p282 = scmp.lt.s32.totalorder %s25, 2
      // Predicated region
      $region37: #{tpu_custom_call.1} parent=5 // pred_check
        %p283 = pneg %p282
      $region38: #{tpu_custom_call.1} parent=5 // pred_check_branch
        %285 = sbr.rel (%p283) target = $region40
      $region39: #{tpu_custom_call.1} parent=5 // pred_region
        // Predicated region
        $region41: #{tpu_custom_call.1} parent=39 // pred_check
          %p286 = pneg %p45
        $region42: #{tpu_custom_call.1} parent=39 // pred_check_branch
          %288 = sbr.rel (%p286) target = $region44
        $region43: #{tpu_custom_call.1} parent=39 // pred_region
          %s289 = sand.u32 %s35, 1
          %s290 = scalar_lea.sflag [#allocation3], %s289
          %s291 = sand.u32 %s35, 1
          %s292 = smul.addr %s291, 4
          %s293 = scalar_lea.vmem [#allocation2], %s292
          %s295 = ssub.s32 64, 64
          %296 = vsyncadd %s290, %s295
          %s297 = smul.addr %s25, 64
          %s298 = scalar_lea.hbm %s0, %s297
          %s300 = sshll.u32 %s293, 4
          %s301 = int_to_ptr.vmem [resolvable:$true] %s300
          %303 = dma.hbm_to_vmem [thread:$0]  %s298, 64, %s301, %s290
        $region44: #{tpu_custom_call.1} parent=39 // pred_fallthru
          _
      $region40: #{tpu_custom_call.1} parent=5 // pred_fallthru
        _
      %p304 = scmp.le.s32.totalorder 1, %s25
      %p305 = scmp.lt.s32.totalorder %s25, 3
      %p306 = pnand %p304, %p305
      %p307 = pneg %p306
      // Predicated region
      $region45: #{tpu_custom_call.1} parent=5 // pred_check
        _
      $region46: #{tpu_custom_call.1} parent=5 // pred_check_branch
        %309 = sbr.rel (%p306) target = $region48
      $region47: #{tpu_custom_call.1} parent=5 // pred_region
        %s310 = ssub.s32 %s25, 1
        %s311 = sand.u32 %s38, 1
        %s312 = scalar_lea.sflag [#allocation3], %s311
        %s313 = sand.u32 %s38, 1
        %s314 = smul.addr %s313, 4
        %s315 = scalar_lea.vmem [#allocation2], %s314
        // Predicated region
        $region49: #{tpu_custom_call.1} parent=47 // pred_check
          %p316 = pneg %p51
        $region50: #{tpu_custom_call.1} parent=47 // pred_check_branch
          %318 = sbr.rel (%p316) target = $region52
        $region51: #{tpu_custom_call.1} parent=47 // pred_region
          %319 = dma.done %s312, 64
        $region52: #{tpu_custom_call.1} parent=47 // pred_fallthru
          _
        // Predicated region
        $region53: #{tpu_custom_call.1} parent=47 // pred_check
          %p320 = pneg %p72
        $region54: #{tpu_custom_call.1} parent=47 // pred_check_branch
          %322 = sbr.rel (%p320) target = $region56
        $region55: #{tpu_custom_call.1} parent=47 // pred_region
          %323 = dma.done [#allocation6], 1024
        $region56: #{tpu_custom_call.1} parent=47 // pred_fallthru
          _
        // Predicated region
        $region57: #{tpu_custom_call.1} parent=47 // pred_check
          %p324 = pneg %p156
        $region58: #{tpu_custom_call.1} parent=47 // pred_check_branch
          %326 = sbr.rel (%p324) target = $region60
        $region59: #{tpu_custom_call.1} parent=47 // pred_region
          %327 = dma.done [#allocation6], 2048
        $region60: #{tpu_custom_call.1} parent=47 // pred_fallthru
          _
        %s328 = sand.u32 %s38, 1
        %s329 = scalar_lea.sflag [#allocation3], %s328
        %s330 = sand.u32 %s38, 1
        %s331 = smul.addr %s330, 4
        %s332 = scalar_lea.vmem [#allocation2], %s331
        %p333 = pneg %p51
        %p334 = pneg %p48
        %p335 = pneg %p72
        %p336 = pneg %p69
        %p337 = pneg %p93
        %p338 = pneg %p90
        %p339 = pneg %p114
        %p340 = pneg %p111
        %p341 = pneg %p135
        %p342 = pneg %p132
        %p343 = pneg %p156
        %p344 = pneg %p153
        %p345 = pneg %p177
        %p346 = pneg %p174
        %p347 = pneg %p203
        %p348 = pneg %p200
        %s349 = sand.u32 %s190, 1
        %s350 = scalar_lea.sflag [#allocation4], %s349
        %s351 = sand.u32 %s190, 1
        %s352 = smul.addr %s351, 8
        %s353 = scalar_lea.vmem [#allocation8], %s352
        %p354 = pneg %p229
        %p355 = pneg %p226
        %s356 = sand.u32 %s216, 1
        %s357 = scalar_lea.sflag [#allocation10], %s356
        %s358 = sand.u32 %s216, 1
        %s359 = smul.addr %s358, 8
        %s360 = scalar_lea.vmem [#allocation9], %s359
        %v362 = vld [vmem:[%s315] sm:$0xf]
        %v363 = vld [vmem:[#allocation5] sm:$0xf]
        %v364 = vld [vmem:[#allocation5 + $0x4] sm:$0xf]
        %v365 = vld [vmem:[#allocation5 + $0x8] sm:$0xf]
        %v366 = vld [vmem:[#allocation5 + $0xc] sm:$0xf]
        %v367 = vld [vmem:[#allocation5 + $0x10] sm:$0xf]
        %v368 = vld [vmem:[#allocation5 + $0x14] sm:$0xf]
        %v369 = vld [vmem:[#allocation5 + $0x18] sm:$0xf]
        %v370 = vld [vmem:[#allocation5 + $0x1c] sm:$0xf]
        %v371 = vld [vmem:[#allocation5 + $0x20] sm:$0xf]
        %v372 = vld [vmem:[#allocation5 + $0x24] sm:$0xf]
        %v373 = vld [vmem:[#allocation5 + $0x28] sm:$0xf]
        %v374 = vld [vmem:[#allocation5 + $0x2c] sm:$0xf]
        %v375 = vld [vmem:[#allocation5 + $0x30] sm:$0xf]
        %v376 = vld [vmem:[#allocation5 + $0x34] sm:$0xf]
        %v377 = vld [vmem:[#allocation5 + $0x38] sm:$0xf]
        %v378 = vld [vmem:[#allocation5 + $0x3c] sm:$0xf]
        %v379 = vld [vmem:[%s2] sm:$0x1]
        %v381 = vlaneseq
        %v382 = vshrl.u32 %v381, 7
        %v383 = vsub.s32 0, %v382
        %v384 = vrot.slane %v379, %v383
        %v402 = vunpack.c.l.b16 %v363
        %v403 = vunpack.c.l.b16 %v364
        %v404 = vunpack.c.l.b16 %v365
        %v405 = vunpack.c.l.b16 %v366
        %v406 = vunpack.c.l.b16 %v367
        %v407 = vunpack.c.l.b16 %v368
        %v408 = vunpack.c.l.b16 %v369
        %v409 = vunpack.c.l.b16 %v370
        %v410 = vunpack.c.l.b16 %v371
        %v411 = vunpack.c.l.b16 %v372
        %v412 = vunpack.c.l.b16 %v373
        %v413 = vunpack.c.l.b16 %v374
        %v414 = vunpack.c.l.b16 %v375
        %v415 = vunpack.c.l.b16 %v376
        %v416 = vunpack.c.l.b16 %v377
        %v417 = vunpack.c.l.b16 %v378
        %v418 = vpack.c.b16 %v403, %v402
        %v419 = vpack.c.b16 %v405, %v404
        %v420 = vpack.c.b16 %v407, %v406
        %v421 = vpack.c.b16 %v409, %v408
        %v422 = vpack.c.b16 %v411, %v410
        %v423 = vpack.c.b16 %v413, %v412
        %v424 = vpack.c.b16 %v415, %v414
        %v425 = vpack.c.b16 %v417, %v416
        %434 = vmatprep.subr.bf16.mxu0 0
        %435 = vmatpush1.bf16.msra.mxu0 %v425
        %436 = vmatprep.subr.bf16.mxu0 0
        %437 = vmatpush1.bf16.msra.mxu0 %v424
        %438 = vmatprep.subr.bf16.mxu0 0
        %439 = vmatpush1.bf16.msra.mxu0 %v423
        %440 = vmatprep.subr.bf16.mxu0 0
        %441 = vmatpush1.bf16.msra.mxu0 %v422
        %442 = vmatprep.subr.bf16.mxu0 0
        %443 = vmatpush1.bf16.msra.mxu0 %v421
        %444 = vmatprep.subr.bf16.mxu0 0
        %445 = vmatpush1.bf16.msra.mxu0 %v420
        %446 = vmatprep.subr.bf16.mxu0 0
        %447 = vmatpush1.bf16.msra.mxu0 %v419
        %448 = vmatprep.subr.bf16.mxu0 0
        %449 = vmatpush1.bf16.msra.mxu0 %v418
        %450 = vmatprep.subr.bf16.mxu0 0
        %451 = vmatpush2.bf16.msra.mxu0 0
        %452 = vmatprep.subr.bf16.mxu0 0
        %453 = vmatpush2.bf16.msra.mxu0 0
        %454 = vmatprep.subr.bf16.mxu0 0
        %455 = vmatpush2.bf16.msra.mxu0 0
        %456 = vmatprep.subr.bf16.mxu0 0
        %457 = vmatpush2.bf16.msra.mxu0 0
        %458 = vmatprep.subr.bf16.mxu0 0
        %459 = vmatpush2.bf16.msra.mxu0 0
        %460 = vmatprep.subr.bf16.mxu0 0
        %461 = vmatpush2.bf16.msra.mxu0 0
        %462 = vmatprep.subr.bf16.mxu0 0
        %463 = vmatpush2.bf16.msra.mxu0 0
        %464 = vmatprep.subr.bf16.mxu0 0
        %465 = vmatpush2.bf16.msra.mxu0 0
        %466 = vmatprep.mubr.bf16.mxu0 0
        %467 = vmatmul.mubr.bf16.gmra.mxu0 %v362
        %v468 = vpop.f32.mrf.mxu0
        %v469 = vadd.f32 %v384, %v468
        %v470 = vpop.f32.mrf.mxu0
        %v471 = vpop.f32.mrf.mxu0
        %v472 = vpop.f32.mrf.mxu0
        %473 = vdwg.mxu0
        %474 = vadd.xlane.f32.xlu0 %v469
        %v475 = vpop.xlane.xlu0 %474
        %v476 = vmul.f32 %v475, 0.03125
        %v477 = vsub.f32 %v469, %v476
        %v478 = vlaneseq
        %v479 = vand.u32 %v478, 127
        %vm480 = vcmp.lt.s32.totalorder %v479, 32
        %v481 = vsel %vm480, 1, 0
        %vm482 = vcmp.eq.s32.totalorder %v481, 1
        %v483 = vsel %vm482, %v477, 0.0
        %v484 = vmul.f32 %v483, %v483
        %485 = vadd.xlane.f32.xlu0 %v484
        %v486 = vpop.xlane.xlu0 %485
        %v487 = vmul.f32 %v486, 0.03125
        %v488 = vadd.f32 %v487, 1e-05
        %v489 = vrsqrt.pop %v488
        %v490 = vmul.f32 %v477, %v489
        %v491 = vld [vmem:[%s3] sm:$0x1]
        %v493 = vlaneseq
        %v494 = vshrl.u32 %v493, 7
        %v495 = vsub.s32 0, %v494
        %v496 = vrot.slane %v491, %v495
        %v498 = vmul.f32 %v490, %v496
        %v499 = vld [vmem:[%s4] sm:$0x1]
        %v501 = vlaneseq
        %v502 = vshrl.u32 %v501, 7
        %v503 = vsub.s32 0, %v502
        %v504 = vrot.slane %v499, %v503
        %v506 = vadd.f32 %v498, %v504
        %v507 = vmax.f32 %v506, 0.0
        %v508 = vpack.c.bf16 %v507, %v507
        %v509 = vld [vmem:[#allocation7] sm:$0xff]
        %v510 = vld [vmem:[#allocation7 + $0x8] sm:$0xff]
        %v511 = vld [vmem:[#allocation7 + $0x10] sm:$0xff]
        %v512 = vld [vmem:[#allocation7 + $0x18] sm:$0xff]
        %v513 = vld [vmem:[#allocation7 + $0x20] sm:$0xff]
        %v514 = vld [vmem:[#allocation7 + $0x28] sm:$0xff]
        %v515 = vld [vmem:[#allocation7 + $0x30] sm:$0xff]
        %v516 = vld [vmem:[#allocation7 + $0x38] sm:$0xff]
        %v517 = vld [vmem:[#allocation7 + $0x40] sm:$0xff]
        %v518 = vld [vmem:[#allocation7 + $0x48] sm:$0xff]
        %v519 = vld [vmem:[#allocation7 + $0x50] sm:$0xff]
        %v520 = vld [vmem:[#allocation7 + $0x58] sm:$0xff]
        %v521 = vld [vmem:[#allocation7 + $0x60] sm:$0xff]
        %v522 = vld [vmem:[#allocation7 + $0x68] sm:$0xff]
        %v523 = vld [vmem:[#allocation7 + $0x70] sm:$0xff]
        %v524 = vld [vmem:[#allocation7 + $0x78] sm:$0xff]
        %v525 = vld [vmem:[%s6] sm:$0x3]
        %v527 = vlaneseq
        %v528 = vshrl.u32 %v527, 7
        %v529 = vsub.s32 0, %v528
        %v530 = vrot.slane %v525, %v529
        %v531 = vlaneseq
        %v532 = vshrl.u32 %v531, 7
        %v533 = vsub.s32 1, %v532
        %v534 = vrot.slane %v525, %v533
        %v553 = vunpack.c.l.b16 %v509
        %v554 = vunpack.c.h.b16 %v509
        %v555 = vunpack.c.l.b16 %v510
        %v556 = vunpack.c.h.b16 %v510
        %v557 = vunpack.c.l.b16 %v511
        %v558 = vunpack.c.h.b16 %v511
        %v559 = vunpack.c.l.b16 %v512
        %v560 = vunpack.c.h.b16 %v512
        %v561 = vunpack.c.l.b16 %v513
        %v562 = vunpack.c.h.b16 %v513
        %v563 = vunpack.c.l.b16 %v514
        %v564 = vunpack.c.h.b16 %v514
        %v565 = vunpack.c.l.b16 %v515
        %v566 = vunpack.c.h.b16 %v515
        %v567 = vunpack.c.l.b16 %v516
        %v568 = vunpack.c.h.b16 %v516
        %v569 = vunpack.c.l.b16 %v517
        %v570 = vunpack.c.h.b16 %v517
        %v571 = vunpack.c.l.b16 %v518
        %v572 = vunpack.c.h.b16 %v518
        %v573 = vunpack.c.l.b16 %v519
        %v574 = vunpack.c.h.b16 %v519
        %v575 = vunpack.c.l.b16 %v520
        %v576 = vunpack.c.h.b16 %v520
        %v577 = vunpack.c.l.b16 %v521
        %v578 = vunpack.c.h.b16 %v521
        %v579 = vunpack.c.l.b16 %v522
        %v580 = vunpack.c.h.b16 %v522
        %v581 = vunpack.c.l.b16 %v523
        %v582 = vunpack.c.h.b16 %v523
        %v583 = vunpack.c.l.b16 %v524
        %v584 = vunpack.c.h.b16 %v524
        %v585 = vpack.c.b16 %v555, %v553
        %v586 = vpack.c.b16 %v556, %v554
        %v587 = vpack.c.b16 %v559, %v557
        %v588 = vpack.c.b16 %v560, %v558
        %v589 = vpack.c.b16 %v563, %v561
        %v590 = vpack.c.b16 %v564, %v562
        %v591 = vpack.c.b16 %v567, %v565
        %v592 = vpack.c.b16 %v568, %v566
        %v593 = vpack.c.b16 %v571, %v569
        %v594 = vpack.c.b16 %v572, %v570
        %v595 = vpack.c.b16 %v575, %v573
        %v596 = vpack.c.b16 %v576, %v574
        %v597 = vpack.c.b16 %v579, %v577
        %v598 = vpack.c.b16 %v580, %v578
        %v599 = vpack.c.b16 %v583, %v581
        %v600 = vpack.c.b16 %v584, %v582
        %617 = vmatprep.subr.bf16.mxu0 %v600
        %618 = vmatpush1.bf16.msra.mxu0 %v599
        %619 = vmatprep.subr.bf16.mxu0 %v598
        %620 = vmatpush1.bf16.msra.mxu0 %v597
        %621 = vmatprep.subr.bf16.mxu0 %v596
        %622 = vmatpush1.bf16.msra.mxu0 %v595
        %623 = vmatprep.subr.bf16.mxu0 %v594
        %624 = vmatpush1.bf16.msra.mxu0 %v593
        %625 = vmatprep.subr.bf16.mxu0 %v592
        %626 = vmatpush1.bf16.msra.mxu0 %v591
        %627 = vmatprep.subr.bf16.mxu0 %v590
        %628 = vmatpush1.bf16.msra.mxu0 %v589
        %629 = vmatprep.subr.bf16.mxu0 %v588
        %630 = vmatpush1.bf16.msra.mxu0 %v587
        %631 = vmatprep.subr.bf16.mxu0 %v586
        %632 = vmatpush1.bf16.msra.mxu0 %v585
        %633 = vmatprep.subr.bf16.mxu0 0
        %634 = vmatpush2.bf16.msra.mxu0 0
        %635 = vmatprep.subr.bf16.mxu0 0
        %636 = vmatpush2.bf16.msra.mxu0 0
        %637 = vmatprep.subr.bf16.mxu0 0
        %638 = vmatpush2.bf16.msra.mxu0 0
        %639 = vmatprep.subr.bf16.mxu0 0
        %640 = vmatpush2.bf16.msra.mxu0 0
        %641 = vmatprep.subr.bf16.mxu0 0
        %642 = vmatpush2.bf16.msra.mxu0 0
        %643 = vmatprep.subr.bf16.mxu0 0
        %644 = vmatpush2.bf16.msra.mxu0 0
        %645 = vmatprep.subr.bf16.mxu0 0
        %646 = vmatpush2.bf16.msra.mxu0 0
        %647 = vmatprep.subr.bf16.mxu0 0
        %648 = vmatpush2.bf16.msra.mxu0 0
        %649 = vmatprep.mubr.bf16.mxu0 0
        %650 = vmatmul.mubr.bf16.gmra.mxu0 %v508
        %v651 = vpop.f32.mrf.mxu0
        %v652 = vadd.f32 %v530, %v651
        %v653 = vpop.f32.mrf.mxu0
        %v654 = vadd.f32 %v534, %v653
        %v655 = vpop.f32.mrf.mxu0
        %v656 = vpop.f32.mrf.mxu0
        %657 = vdwg.mxu0
        %658 = vst [vmem:[%s353] sm:$0xff] %v652
        %v659 = vtanh.pop %v654
        %v660 = vmul.f32 %v659, 4.99995
        %v661 = vadd.f32 %v660, 5.00005
        %662 = vst [vmem:[%s360] sm:$0xff] %v661
        %s663 = sand.u32 %s190, 1
        %s664 = scalar_lea.sflag [#allocation4], %s663
        %s665 = sand.u32 %s190, 1
        %s666 = smul.addr %s665, 8
        %s667 = scalar_lea.vmem [#allocation8], %s666
        %s668 = sand.u32 %s216, 1
        %s669 = scalar_lea.sflag [#allocation10], %s668
        %s670 = sand.u32 %s216, 1
        %s671 = smul.addr %s670, 8
        %s672 = scalar_lea.vmem [#allocation9], %s671
        // Predicated region
        $region61: #{tpu_custom_call.1} parent=47 // pred_check
          %p673 = pneg %p200
        $region62: #{tpu_custom_call.1} parent=47 // pred_check_branch
          %675 = sbr.rel (%p673) target = $region64
        $region63: #{tpu_custom_call.1} parent=47 // pred_region
          %s677 = ssub.s32 128, 128
          %678 = vsyncadd %s664, %s677
          %s679 = smul.addr %s30, 128
          %s680 = scalar_lea.hbm %s7, %s679
          %s682 = sshll.u32 %s667, 4
          %s683 = int_to_ptr.vmem [resolvable:$true] %s682
          %685 = dma.vmem_to_hbm [thread:$0]  %s683, 128, %s680, %s664
        $region64: #{tpu_custom_call.1} parent=47 // pred_fallthru
          _
        // Predicated region
        $region65: #{tpu_custom_call.1} parent=47 // pred_check
          %p686 = pneg %p226
        $region66: #{tpu_custom_call.1} parent=47 // pred_check_branch
          %688 = sbr.rel (%p686) target = $region68
        $region67: #{tpu_custom_call.1} parent=47 // pred_region
          %s690 = ssub.s32 128, 128
          %691 = vsyncadd %s669, %s690
          %s692 = smul.addr %s30, 128
          %s693 = scalar_lea.hbm %s8, %s692
          %s695 = sshll.u32 %s672, 4
          %s696 = int_to_ptr.vmem [resolvable:$true] %s695
          %698 = dma.vmem_to_hbm [thread:$0]  %s696, 128, %s693, %s669
        $region68: #{tpu_custom_call.1} parent=47 // pred_fallthru
          _
      $region48: #{tpu_custom_call.1} parent=5 // pred_fallthru
        _
      %p699 = scmp.le.s32.totalorder 2, %s25
      // Predicated region
      $region69: #{tpu_custom_call.1} parent=5 // pred_check
        %p700 = pneg %p699
      $region70: #{tpu_custom_call.1} parent=5 // pred_check_branch
        %702 = sbr.rel (%p700) target = $region72
      $region71: #{tpu_custom_call.1} parent=5 // pred_region
        %s703 = ssub.s32 %s25, 2
        // Predicated region
        $region73: #{tpu_custom_call.1} parent=71 // pred_check
          %p704 = pneg %p206
        $region74: #{tpu_custom_call.1} parent=71 // pred_check_branch
          %706 = sbr.rel (%p704) target = $region76
        $region75: #{tpu_custom_call.1} parent=71 // pred_region
          %s707 = sand.u32 %s191, 1
          %s708 = scalar_lea.sflag [#allocation4], %s707
          %s709 = sand.u32 %s191, 1
          %s710 = smul.addr %s709, 8
          %s711 = scalar_lea.vmem [#allocation8], %s710
          %712 = dma.done %s708, 128
        $region76: #{tpu_custom_call.1} parent=71 // pred_fallthru
          _
        // Predicated region
        $region77: #{tpu_custom_call.1} parent=71 // pred_check
          %p713 = pneg %p232
        $region78: #{tpu_custom_call.1} parent=71 // pred_check_branch
          %715 = sbr.rel (%p713) target = $region80
        $region79: #{tpu_custom_call.1} parent=71 // pred_region
          %s716 = sand.u32 %s217, 1
          %s717 = scalar_lea.sflag [#allocation10], %s716
          %s718 = sand.u32 %s217, 1
          %s719 = smul.addr %s718, 8
          %s720 = scalar_lea.vmem [#allocation9], %s719
          %721 = dma.done %s717, 128
        $region80: #{tpu_custom_call.1} parent=71 // pred_fallthru
          _
      $region72: #{tpu_custom_call.1} parent=5 // pred_fallthru
        _
    $region6: #{tpu_custom_call.1} parent=1 // loop_footer
      %s29 = sadd.s32 1, %s25
    $region7: #{tpu_custom_call.1} parent=1 // loop_footer_branch
      %24 = sbr.rel target = $region3
    $region8: #{tpu_custom_call.1} parent=1 // loop_exit
      _
    %722 = vsyncpa [#allocation3], 1
    %s723 = scalar_lea.sflag [#allocation3], 1
    %724 = vsyncpa %s723, 1
    %725 = vsyncpa [#allocation6], 1
    %726 = vsyncpa [#allocation4], 1
    %s727 = scalar_lea.sflag [#allocation4], 1
    %728 = vsyncpa %s727, 1
    %729 = vsyncpa [#allocation10], 1
    %s730 = scalar_lea.sflag [#allocation10], 1
    %731 = vsyncpa %s730, 1

</llo_original>
